<compile_context>
chip_gen: v6e
topology: v6e:2x2x1
jax: 0.10.0
libtpu: 0.0.40
codegen_flags: <defaults>
</compile_context>

<pallas_src>
import functools
import math

import jax
import jax.numpy as jnp
from jax import lax
from jax.experimental import pallas as pl
from jax.experimental.pallas import tpu as pltpu

SQRT2 = math.sqrt(2.0)

# [1,3,3,1]/4 per axis == separable form of the outer([1,3,3,1]) kernel,
# normalised and scaled by factor**2 (factor == 2), as used by every
# Blur/Upsample call site in this module.
_FIR_TAPS = (0.25, 0.75, 0.75, 0.25)


def _round128(n):
    return ((n + 127) // 128) * 128


def _vmem_limit_bytes():
    """~3/4 of physical VMEM (96 MiB on v5e/v6e, 48 MiB on v7x); 64 MiB fallback."""
    try:
        info = pltpu.get_tpu_info()
        for name in ("vmem_capacity_bytes", "vmem_size_bytes", "vmem_bytes"):
            cap = getattr(info, name, None)
            if cap:
                return int(min(cap * 3 // 4, 100 * 1024 * 1024))
    except Exception:
        pass
    return 64 * 1024 * 1024


VMEM_LIMIT = _vmem_limit_bytes()


def _cparams(*sem):
    return pltpu.CompilerParams(dimension_semantics=sem,
                                vmem_limit_bytes=VMEM_LIMIT)


def _probe_single_buffer():
    """Feature-test pl.Buffered(1) so grid-constant weight blocks can skip the
    redundant second pipeline buffer without risking a lowering failure."""
    try:
        def k(x_ref, o_ref):
            o_ref[...] = x_ref[...] + 1.0

        x = jnp.zeros((8, 128), jnp.float32)
        out = pl.pallas_call(
            k,
            out_shape=jax.ShapeDtypeStruct((8, 128), jnp.float32),
            grid=(1,),
            in_specs=[pl.BlockSpec((8, 128), lambda i: (0, 0),
                                   pipeline_mode=pl.Buffered(1))],
            out_specs=pl.BlockSpec((8, 128), lambda i: (0, 0)),
            compiler_params=_cparams("arbitrary"),
        )(x)
        jax.block_until_ready(out)
        return bool(jnp.all(out == 1.0))
    except Exception:
        return False


_SINGLE_BUFFER_OK = _probe_single_buffer()


def _const_spec(block_shape, index_map):
    """BlockSpec for weight blocks whose index_map is constant over the grid."""
    if _SINGLE_BUFFER_OK:
        return pl.BlockSpec(block_shape, index_map, pipeline_mode=pl.Buffered(1))
    return pl.BlockSpec(block_shape, index_map)


# --------------------------------------------------------------------------
# Geometry / layout helpers (flattened, lane-padded spatial axis)
# --------------------------------------------------------------------------
def _conv_geom(H, W, k, pad):
    hp, wp = H + 2 * pad, W + 2 * pad
    ho, wo = hp - (k - 1), wp - (k - 1)
    lo = ho * wp
    lo_pad = _round128(lo)
    max_off = (k - 1) * (wp + 1)
    lpad = _round128(max(hp * wp, max_off + lo_pad))
    # Valid outputs (cols < wo) only ever read the symmetric spatial padding;
    # the discarded wrap columns read the zero tail below lpad.
    assert wo + (k - 1) <= wp and max_off + lo_pad <= lpad
    return dict(hp=hp, wp=wp, ho=ho, wo=wo, lo=lo, lo_pad=lo_pad, lpad=lpad,
                offsets=tuple(a * wp + b for a in range(k) for b in range(k)))


def _fir_geom(H, W, pad0, pad1):
    hp, wp = H + pad0 + pad1, W + pad0 + pad1
    ho, wo = hp - 3, wp - 3
    lo = ho * wp
    lo_pad = _round128(lo)
    lv = lo_pad + 128
    lin = _round128(max(hp * wp, 3 * wp + lv))
    return dict(hp=hp, wp=wp, ho=ho, wo=wo, lo=lo, lo_pad=lo_pad, lv=lv, lin=lin)


def _pad_flat(x, pt, pb, pleft, pright, lpad):
    B, C, H, W = x.shape
    xp = jnp.pad(x.astype(jnp.float32),
                 ((0, 0), (0, 0), (pt, pb), (pleft, pright)))
    l0 = (H + pt + pb) * (W + pleft + pright)
    return jnp.pad(xp.reshape(B, C, l0), ((0, 0), (0, 0), (0, lpad - l0)))


def _unflatten(a, g):
    B, C = a.shape[0], a.shape[1]
    return a[:, :, :g['lo']].reshape(B, C, g['ho'], g['wp'])[:, :, :, :g['wo']]


def _row_tile(n, per_row_bytes, budget=8 << 20):
    cap = int(max(1, min(n, budget // max(per_row_bytes, 1), 512)))
    for t in range(cap, 0, -1):
        if n % t == 0 and (t % 8 == 0 or t == n):
            return t
    return n


# --------------------------------------------------------------------------
# Pallas kernels
# --------------------------------------------------------------------------
def _style_mod_kernel(z_ref, wm_ref, bm_ref, wmod_ref, bmod_ref, o_ref, *, n_mlp):
    """PixelNorm + n_mlp EqualLinear(fused_lrelu) + ALL per-layer modulation
    EqualLinears fused into one kernel (single style, truncation=1)."""
    s = z_ref[...]
    s = s * lax.rsqrt(jnp.mean(s * s, axis=1, keepdims=True) + 1e-8)      # PixelNorm
    for i in range(n_mlp):
        y = jnp.dot(s, wm_ref[i], preferred_element_type=jnp.float32) + bm_ref[i]
        s = jnp.where(y >= 0.0, y, 0.2 * y) * SQRT2                        # fused_lrelu
    o_ref[...] = (jnp.dot(s, wmod_ref[...], preferred_element_type=jnp.float32)
                  + bmod_ref[...])


def pallas_style_mod(z, wm, bm, wmod, bmod):
    B, D = z.shape
    n_mlp = wm.shape[0]
    Tp = wmod.shape[1]
    return pl.pallas_call(
        functools.partial(_style_mod_kernel, n_mlp=n_mlp),
        out_shape=jax.ShapeDtypeStruct((B, Tp), jnp.float32),
        grid=(1,),
        in_specs=[
            pl.BlockSpec((B, D), lambda i: (0, 0)),
            pl.BlockSpec((n_mlp, D, D), lambda i: (0, 0, 0)),
            pl.BlockSpec((n_mlp, 1, D), lambda i: (0, 0, 0)),
            pl.BlockSpec((D, Tp), lambda i: (0, 0)),
            pl.BlockSpec((1, Tp), lambda i: (0, 0)),
        ],
        out_specs=pl.BlockSpec((B, Tp), lambda i: (0, 0)),
        compiler_params=_cparams("arbitrary"),
    )(z.astype(jnp.float32), wm, bm, wmod, bmod)


def _fused_layer_kernel(*refs, offsets, lo, c_feat, fuse_rgb):
    """Non-upsample MaskedStyledConv layer, fully fused:
       in-kernel input formation -> k*k tap GEMMs -> demod -> ToMask (-> ToRGB)."""
    if fuse_rgb:
        (x_ref, n_ref, m_ref, sx_ref, d_ref, w_ref, wm_ref, sr_ref, wr_ref,
         drv_ref, mout_ref, rgb_ref, xin_ref) = refs
    else:
        (x_ref, n_ref, m_ref, sx_ref, d_ref, w_ref, wm_ref,
         drv_ref, mout_ref, xin_ref) = refs
        sr_ref = wr_ref = rgb_ref = None

    mask = m_ref[...]                                 # (1, Lpad)
    sx = sx_ref[...]                                  # (2C, 1)
    # NoiseInjection(isconcat) blend + concat + style modulation, formed once
    # in VMEM (f32 math, single bf16 cast right before the MXU).
    xin_ref[:c_feat, :] = (mask * x_ref[...] * sx[:c_feat]).astype(jnp.bfloat16)
    xin_ref[c_feat:, :] = ((1.0 - mask) * n_ref[...] * sx[c_feat:]).astype(jnp.bfloat16)

    # k*k tap GEMMs: slice the INPUT per tap, accumulate in f32 (no per-tap
    # full-width scratch store/reload).
    acc = jnp.dot(w_ref[0], xin_ref[:, offsets[0]:offsets[0] + lo],
                  preferred_element_type=jnp.float32)
    for t in range(1, len(offsets)):
        off = offsets[t]
        acc = acc + jnp.dot(w_ref[t], xin_ref[:, off:off + lo],
                            preferred_element_type=jnp.float32)
    drv = acc * d_ref[...]                            # demodulate the output
    drv_ref[...] = drv

    # Fused ToMask / ToRGB 1x1 convs while drv is still in VMEM.
    drv_bf = drv.astype(jnp.bfloat16)
    mout_ref[...] = jnp.dot(wm_ref[...], drv_bf, preferred_element_type=jnp.float32)
    if fuse_rgb:
        rgb_ref[...] = jnp.dot(wr_ref[...], (drv * sr_ref[...]).astype(jnp.bfloat16),
                               preferred_element_type=jnp.float32)


def _scaled_conv_kernel(x_ref, sx_ref, d_ref, w_ref, o_ref, xin_ref, *, offsets, lo):
    """Scale-input / demodulate-output modulated conv over an already
    zero-dilated (conv-transpose) input."""
    xin_ref[...] = (x_ref[...] * sx_ref[...]).astype(jnp.bfloat16)
    acc = jnp.dot(w_ref[0], xin_ref[:, offsets[0]:offsets[0] + lo],
                  preferred_element_type=jnp.float32)
    for t in range(1, len(offsets)):
        off = offsets[t]
        acc = acc + jnp.dot(w_ref[t], xin_ref[:, off:off + lo],
                            preferred_element_type=jnp.float32)
    o_ref[...] = acc * d_ref[...]


def _fir_body(x_ref, v_ref, wp, lo):
    """Separable 4x4 FIR on a flattened (rows, L) layout: vertical pass into a
    VMEM scratch, then a 4-tap horizontal pass from shifted slices."""
    t = _FIR_TAPS
    lv = v_ref.shape[-1]
    v_ref[...] = (t[0] * x_ref[:, 0:lv] + t[1] * x_ref[:, wp:wp + lv]
                  + t[2] * x_ref[:, 2 * wp:2 * wp + lv]
                  + t[3] * x_ref[:, 3 * wp:3 * wp + lv])
    return (t[0] * v_ref[:, 0:lo] + t[1] * v_ref[:, 1:1 + lo]
            + t[2] * v_ref[:, 2:2 + lo] + t[3] * v_ref[:, 3:3 + lo])


def _fir_kernel(x_ref, o_ref, v_ref, *, wp, lo):
    o_ref[...] = _fir_body(x_ref, v_ref, wp, lo)


def _blur_mask_kernel(x_ref, wm_ref, drv_ref, m_ref, v_ref, *, wp, lo):
    """Blur(pad=(1,1)) after the conv-transpose, fused with the ToMask 1x1."""
    out = _fir_body(x_ref, v_ref, wp, lo)
    drv_ref[...] = out
    m_ref[...] = jnp.dot(wm_ref[...], out.astype(jnp.bfloat16),
                         preferred_element_type=jnp.float32)


# --------------------------------------------------------------------------
# Kernel wrappers
# --------------------------------------------------------------------------
def fused_layer(p, x, noise, mask, s_mod, rgb_w=None, rgb_style=None):
    """Non-upsample MaskedStyledConv (+ fused ToMask, optionally fused ToRGB)."""
    B, C, H, W = x.shape
    cp = p['conv']
    kk, Cout, Cin2 = cp['taps'].shape
    assert Cin2 == 2 * C and kk == 9
    g = _conv_geom(H, W, 3, 1)

    xf = _pad_flat(x, 1, 1, 1, 1, g['lpad'])
    nf = _pad_flat(noise, 1, 1, 1, 1, g['lpad'])
    mf = _pad_flat(mask, 1, 1, 1, 1, g['lpad'])
    sx = jnp.concatenate([s_mod[:, :C], s_mod[:, C:] * p['noise_weight']],
                         axis=1)[..., None].astype(jnp.float32)
    d = lax.rsqrt(jnp.einsum('bi,oi->bo', s_mod * s_mod, cp['wsq']) + 1e-8)[..., None]
    fuse_rgb = rgb_w is not None

    in_specs = [
        pl.BlockSpec((None, C, g['lpad']), lambda b: (b, 0, 0)),
        pl.BlockSpec((None, C, g['lpad']), lambda b: (b, 0, 0)),
        pl.BlockSpec((None, 1, g['lpad']), lambda b: (b, 0, 0)),
        pl.BlockSpec((None, 2 * C, 1), lambda b: (b, 0, 0)),
        pl.BlockSpec((None, Cout, 1), lambda b: (b, 0, 0)),
        _const_spec((kk, Cout, 2 * C), lambda b: (0, 0, 0)),
        _const_spec((1, Cout), lambda b: (0, 0)),
    ]
    args = [xf, nf, mf, sx, d, cp['taps'], p['w_mask']]
    out_shape = [jax.ShapeDtypeStruct((B, Cout, g['lo_pad']), jnp.float32),
                 jax.ShapeDtypeStruct((B, 1, g['lo_pad']), jnp.float32)]
    out_specs = [pl.BlockSpec((None, Cout, g['lo_pad']), lambda b: (b, 0, 0)),
                 pl.BlockSpec((None, 1, g['lo_pad']), lambda b: (b, 0, 0))]
    if fuse_rgb:
        in_specs += [pl.BlockSpec((None, Cout, 1), lambda b: (b, 0, 0)),
                     _const_spec((3, Cout), lambda b: (0, 0))]
        args += [rgb_style[..., None].astype(jnp.float32), rgb_w]
        out_shape.append(jax.ShapeDtypeStruct((B, 3, g['lo_pad']), jnp.float32))
        out_specs.append(pl.BlockSpec((None, 3, g['lo_pad']), lambda b: (b, 0, 0)))

    outs = pl.pallas_call(
        functools.partial(_fused_layer_kernel, offsets=g['offsets'],
                          lo=g['lo_pad'], c_feat=C, fuse_rgb=fuse_rgb),
        out_shape=tuple(out_shape),
        grid=(B,),
        in_specs=in_specs,
        out_specs=tuple(out_specs),
        scratch_shapes=[pltpu.VMEM((2 * C, g['lpad']), jnp.bfloat16)],
        compiler_params=_cparams("parallel"),
    )(*args)

    drv = _unflatten(outs[0], g)
    m_new = _unflatten(outs[1], g)
    rgb = _unflatten(outs[2], g) if fuse_rgb else None
    return drv, m_new, rgb


def scaled_conv(x, sx, d, taps, *, k, pad):
    """Per-channel style-scaled conv (demod on the output) over a pre-dilated input."""
    B, Cin, H, W = x.shape
    kk, Cout, Cin_w = taps.shape
    assert kk == k * k and Cin_w == Cin
    g = _conv_geom(H, W, k, pad)
    xf = _pad_flat(x, pad, pad, pad, pad, g['lpad'])
    out = pl.pallas_call(
        functools.partial(_scaled_conv_kernel, offsets=g['offsets'], lo=g['lo_pad']),
        out_shape=jax.ShapeDtypeStruct((B, Cout, g['lo_pad']), jnp.float32),
        grid=(B,),
        in_specs=[pl.BlockSpec((None, Cin, g['lpad']), lambda b: (b, 0, 0)),
                  pl.BlockSpec((None, Cin, 1), lambda b: (b, 0, 0)),
                  pl.BlockSpec((None, Cout, 1), lambda b: (b, 0, 0)),
                  _const_spec((kk, Cout, Cin), lambda b: (0, 0, 0))],
        out_specs=pl.BlockSpec((None, Cout, g['lo_pad']), lambda b: (b, 0, 0)),
        scratch_shapes=[pltpu.VMEM((Cin, g['lpad']), jnp.bfloat16)],
        compiler_params=_cparams("parallel"),
    )(xf, sx.astype(jnp.float32), d, taps)
    return _unflatten(out, g)


def blur_tomask(x, w_mask, pad0, pad1):
    """Blur(pad) fused with the ToMask 1x1 conv (style==1, demodulate=False)."""
    B, C, H, W = x.shape
    g = _fir_geom(H, W, pad0, pad1)
    xf = _pad_flat(x, pad0, pad1, pad0, pad1, g['lin'])
    outs = pl.pallas_call(
        functools.partial(_blur_mask_kernel, wp=g['wp'], lo=g['lo_pad']),
        out_shape=(jax.ShapeDtypeStruct((B, C, g['lo_pad']), jnp.float32),
                   jax.ShapeDtypeStruct((B, 1, g['lo_pad']), jnp.float32)),
        grid=(B,),
        in_specs=[pl.BlockSpec((None, C, g['lin']), lambda b: (b, 0, 0)),
                  _const_spec((1, C), lambda b: (0, 0))],
        out_specs=(pl.BlockSpec((None, C, g['lo_pad']), lambda b: (b, 0, 0)),
                   pl.BlockSpec((None, 1, g['lo_pad']), lambda b: (b, 0, 0))),
        scratch_shapes=[pltpu.VMEM((C, g['lv']), jnp.float32)],
        compiler_params=_cparams("parallel"),
    )(xf, w_mask)
    return _unflatten(outs[0], g), _unflatten(outs[1], g)


def fir_blur(x, pad0, pad1, up=1):
    """upfirdn2d with the factor-2 scaled [1,3,3,1] kernel."""
    B, C, H, W = x.shape
    x = x.astype(jnp.float32)
    if up == 2:
        # TODO(synk): polyphase up=2 path; only 1- and 3-channel skip maps use it.
        x = jnp.zeros((B, C, 2 * H, 2 * W), jnp.float32).at[:, :, ::2, ::2].set(x)
        H, W = 2 * H, 2 * W
    g = _fir_geom(H, W, pad0, pad1)
    xf = _pad_flat(x, pad0, pad1, pad0, pad1, g['lin']).reshape(B * C, g['lin'])
    N = B * C
    per_row = 4 * (2 * g['lin'] + 2 * g['lo_pad'] + g['lv'])
    nb = _row_tile(N, per_row)
    out = pl.pallas_call(
        functools.partial(_fir_kernel, wp=g['wp'], lo=g['lo_pad']),
        out_shape=jax.ShapeDtypeStruct((N, g['lo_pad']), jnp.float32),
        grid=(N // nb,),
        in_specs=[pl.BlockSpec((nb, g['lin']), lambda i: (i, 0))],
        out_specs=pl.BlockSpec((nb, g['lo_pad']), lambda i: (i, 0)),
        scratch_shapes=[pltpu.VMEM((nb, g['lv']), jnp.float32)],
        compiler_params=_cparams("parallel"),
    )(xf)
    out = out[:, :g['lo']].reshape(B, C, g['ho'], g['wp'])[:, :, :, :g['wo']]
    return out


# --------------------------------------------------------------------------
# Generator parameters (prepared for the kernels)
# --------------------------------------------------------------------------
def init_generator(key, size, style_dim, n_mlp, size_start,
                   channel_multiplier=2, narrow=1.0, lr_mlp=0.01):
    channels = {4: int(512 * narrow), 8: int(512 * narrow), 16: int(512 * narrow),
                32: int(512 * narrow), 64: int(256 * channel_multiplier * narrow),
                128: int(128 * channel_multiplier * narrow),
                256: int(64 * channel_multiplier * narrow),
                512: int(32 * channel_multiplier * narrow),
                1024: int(16 * channel_multiplier * narrow),
                2048: int(8 * channel_multiplier * narrow)}
    feat_mult = 2
    log_size, log_size_start = int(math.log2(size)), int(math.log2(size_start))
    D = style_dim
    keys = iter(jax.random.split(key, 512))

    # Style MLP (weights pre-transposed / pre-scaled; EqualLinear init randn/lr_mul)
    scale_mlp = (1.0 / math.sqrt(D)) * lr_mlp
    mlp_w = jnp.stack([(jax.random.normal(next(keys), (D, D), jnp.float32) / lr_mlp
                        * scale_mlp).T for _ in range(n_mlp)])
    mlp_b = jnp.zeros((n_mlp, 1, D), jnp.float32)

    mod_cols, seg_sizes = [], []

    def add_mod(in_ch):
        w = jax.random.normal(next(keys), (in_ch, D), jnp.float32) * (1.0 / math.sqrt(D))
        mod_cols.append(w.T)
        seg_sizes.append(in_ch)
        return len(seg_sizes) - 1

    def conv_weight(in_ch, out_ch, k, flip):
        w = jax.random.normal(next(keys), (out_ch, in_ch, k, k), jnp.float32)
        ws = w * (1.0 / math.sqrt(in_ch * k * k))       # EqualConv scale folded in
        wt = ws[:, :, ::-1, ::-1] if flip else ws       # spatial flip for transpose path
        taps = wt.transpose(2, 3, 0, 1).reshape(k * k, out_ch, in_ch).astype(jnp.bfloat16)
        return ws, taps

    def masked_conv(in_feat, out_ch, upsample=False):
        ws, taps = conv_weight(2 * in_feat, out_ch, 3, upsample)
        # ToMask: style parameter is zeros => modulation == 1 (EqualLinear bias=1)
        # and demodulate=False, so the modulated 1x1 conv folds to a scaled conv.
        wmask = (jax.random.normal(next(keys), (1, out_ch), jnp.float32)
                 * (1.0 / math.sqrt(out_ch))).astype(jnp.bfloat16)
        return dict(conv=dict(taps=taps, wsq=jnp.sum(ws * ws, axis=(2, 3)),
                              mod_idx=add_mod(2 * in_feat)),
                    upsample=upsample,
                    noise_weight=jnp.zeros((), jnp.float32),
                    w_mask=wmask)

    def to_rgb(in_ch):
        w = jax.random.normal(next(keys), (3, in_ch), jnp.float32) * (1.0 / math.sqrt(in_ch))
        return dict(w=w.astype(jnp.bfloat16), mod_idx=add_mod(in_ch),
                    bias=jnp.zeros((1, 3, 1, 1), jnp.float32))

    C0 = channels[size_start]
    params = dict(channels=channels,
                  conv1=masked_conv(C0, C0 * feat_mult),
                  to_rgb1=to_rgb(C0 * feat_mult),
                  convs=[], to_rgbs=[])
    in_ch = C0 * feat_mult
    for i in range(log_size_start + 1, log_size + 1):
        out_ch = channels[2 ** i]
        params['convs'].append(masked_conv(in_ch, out_ch, upsample=True))
        params['convs'].append(masked_conv(out_ch, out_ch))
        params['to_rgbs'].append(to_rgb(out_ch))
        in_ch = out_ch

    T = sum(seg_sizes)
    Tp = max(128, _round128(T))                       # lane-dense fused-mod output
    wmod = jnp.pad(jnp.concatenate(mod_cols, axis=1), ((0, 0), (0, Tp - T)))
    bmod = jnp.pad(jnp.ones((1, T), jnp.float32), ((0, 0), (0, Tp - T)))
    seg_off, off = [], 0
    for s in seg_sizes:
        seg_off.append(off)
        off += s
    params.update(mlp_w=mlp_w, mlp_b=mlp_b, mod_w=wmod, mod_b=bmod,
                  seg_off=tuple(seg_off), seg_sizes=tuple(seg_sizes))
    return params


# --------------------------------------------------------------------------
# Forward pass (JAX glue around the kernels)
# --------------------------------------------------------------------------
def upsample_layer(p, x, noise, mask, s_mod):
    """MaskedStyledConv with upsample=True: conv_transpose(stride 2) + Blur,
    with the ToMask fused into the blur kernel, plus the Upsample(mask) skip."""
    B, C, H, W = x.shape
    cp = p['conv']
    sx = jnp.concatenate([s_mod[:, :C], s_mod[:, C:] * p['noise_weight']],
                         axis=1)[..., None].astype(jnp.float32)
    d = lax.rsqrt(jnp.einsum('bi,oi->bo', s_mod * s_mod, cp['wsq']) + 1e-8)[..., None]
    # conv_transpose2d(stride=2) == zero-dilate + pad(k-1) + conv(flipped w)
    # TODO(synk): polyphase-decompose instead of zero-stuffing this intermediate.
    xin = jnp.concatenate([mask * x, (1.0 - mask) * noise], axis=1)
    xd = jnp.zeros((B, 2 * C, 2 * H - 1, 2 * W - 1), jnp.float32
                   ).at[:, :, ::2, ::2].set(xin)
    conv = scaled_conv(xd, sx, d, cp['taps'], k=3, pad=2)     # (B,Cout,2H+1,2W+1)
    drv, m_new = blur_tomask(conv, p['w_mask'], 1, 1)         # Blur(pad=(1,1)) + ToMask
    return drv, m_new + fir_blur(mask, 2, 1, up=2)            # Upsample(mask_prev)


def generator_forward(params, styles, feat, mask, noise):
    mods = pallas_style_mod(styles[0], params['mlp_w'], params['mlp_b'],
                            params['mod_w'], params['mod_b'])

    def smod(idx):
        o = params['seg_off'][idx]
        return mods[:, o:o + params['seg_sizes'][idx]]

    p1, r1 = params['conv1'], params['to_rgb1']
    out, m_new, rgb = fused_layer(p1, feat, noise[0], mask,
                                  smod(p1['conv']['mod_idx']),
                                  rgb_w=r1['w'], rgb_style=smod(r1['mod_idx']))
    m = m_new + mask
    skip = rgb + r1['bias']

    for idx, rp in enumerate(params['to_rgbs']):
        c1, c2 = params['convs'][2 * idx], params['convs'][2 * idx + 1]
        out, m = upsample_layer(c1, out, noise[1 + 2 * idx], m,
                                smod(c1['conv']['mod_idx']))
        out, m_new, rgb = fused_layer(c2, out, noise[2 + 2 * idx], m,
                                      smod(c2['conv']['mod_idx']),
                                      rgb_w=rp['w'], rgb_style=smod(rp['mod_idx']))
        m = m_new + m
        skip = rgb + rp['bias'] + fir_blur(skip, 2, 1, up=2)
    # needs_multi_res=False, needs_mask=False, return_latents=False
    return [skip], [m], None


# --------------------------------------------------------------------------
def _assert_close(a, b, tol):
    err = float(jnp.max(jnp.abs(a - b)))
    ref = float(jnp.max(jnp.abs(b)))
    assert err <= tol * (1.0 + ref), (err, ref)


if __name__ == "__main__":
    key = jax.random.PRNGKey(0)
    kp, kz, kf, km, kn0, kn1, kn2 = jax.random.split(key, 7)

    B = 2
    size, size_start, style_dim, n_mlp = 16, 8, 32, 2
    narrow = 1.0 / 32.0                      # channels[8] = channels[16] = 16

    params = init_generator(kp, size, style_dim, n_mlp, size_start,
                            channel_multiplier=2, narrow=narrow)
    C0 = params['channels'][size_start]      # 16
    C1 = params['channels'][size]            # 16

    # ---- numerical sanity checks of the pallas kernels ----
    # 1) fused masked conv layer (with ToMask + ToRGB epilogue)
    p1, r1 = params['conv1'], params['to_rgb1']
    p_chk = dict(p1, noise_weight=jnp.float32(0.3))   # exercise the noise half
    Cout1 = 2 * C0
    kx = jax.random.split(jax.random.PRNGKey(7), 6)
    x_t = jax.random.normal(kx[0], (B, C0, size_start, size_start), jnp.float32)
    n_t = jax.random.normal(kx[1], (B, C0, size_start, size_start), jnp.float32)
    m_t = jax.nn.sigmoid(jax.random.normal(kx[2], (B, 1, size_start, size_start),
                                           jnp.float32))
    s_t = 1.0 + 0.3 * jax.random.normal(kx[3], (B, 2 * C0), jnp.float32)
    sr_t = 1.0 + 0.3 * jax.random.normal(kx[4], (B, Cout1), jnp.float32)
    drv, m_new, rgb = fused_layer(p_chk, x_t, n_t, m_t, s_t,
                                  rgb_w=r1['w'], rgb_style=sr_t)
    sx_a = s_t[:, :C0, None, None]
    sx_b = (s_t[:, C0:] * p_chk['noise_weight'])[:, :, None, None]
    xin_ref = jnp.concatenate([m_t * x_t * sx_a, (1.0 - m_t) * n_t * sx_b], axis=1)
    xin_ref = xin_ref.astype(jnp.bfloat16).astype(jnp.float32)
    w_oihw = (p1['conv']['taps'].astype(jnp.float32)
              .reshape(3, 3, Cout1, 2 * C0).transpose(2, 3, 0, 1))
    conv_ref = lax.conv_general_dilated(
        xin_ref, w_oihw, (1, 1), 'SAME',
        dimension_numbers=('NCHW', 'OIHW', 'NCHW'), precision=lax.Precision.HIGHEST)
    d_ref = lax.rsqrt(jnp.einsum('bi,oi->bo', s_t * s_t, p1['conv']['wsq']) + 1e-8)
    drv_ref = conv_ref * d_ref[:, :, None, None]
    drv_bf = drv_ref.astype(jnp.bfloat16).astype(jnp.float32)
    m_ref_ = jnp.einsum('oc,bchw->bohw', p1['w_mask'].astype(jnp.float32), drv_bf)
    rgb_ref_ = jnp.einsum('oc,bchw->bohw', r1['w'].astype(jnp.float32),
                          (drv_ref * sr_t[:, :, None, None])
                          .astype(jnp.bfloat16).astype(jnp.float32))
    _assert_close(drv, drv_ref, 2e-3)
    _assert_close(m_new, m_ref_, 5e-3)
    _assert_close(rgb, rgb_ref_, 5e-3)

    # 2) scaled conv (pad=2, used by the conv-transpose path)
    c_up = params['convs'][0]['conv']
    _, Co_u, Ci_u = c_up['taps'].shape
    xu_t = jax.random.normal(kx[5], (B, Ci_u, 9, 9), jnp.float32)
    sx_t = 1.0 + 0.2 * jax.random.normal(jax.random.PRNGKey(11), (B, Ci_u, 1),
                                         jnp.float32)
    d_t = 0.5 + jax.random.uniform(jax.random.PRNGKey(12), (B, Co_u, 1), jnp.float32)
    got = scaled_conv(xu_t, sx_t, d_t, c_up['taps'], k=3, pad=2)
    wu = c_up['taps'].astype(jnp.float32).reshape(3, 3, Co_u, Ci_u).transpose(2, 3, 0, 1)
    ref = lax.conv_general_dilated(
        (xu_t * sx_t[..., None]).astype(jnp.bfloat16).astype(jnp.float32), wu, (1, 1),
        ((2, 2), (2, 2)), dimension_numbers=('NCHW', 'OIHW', 'NCHW'),
        precision=lax.Precision.HIGHEST) * d_t[..., None]
    _assert_close(got, ref, 2e-3)

    # 3) up=2 FIR (Upsample module)
    xm = jax.random.normal(jax.random.PRNGKey(8), (B, 3, 8, 8), jnp.float32)
    got = fir_blur(xm, 2, 1, up=2)
    xu = jnp.zeros((B, 3, 16, 16), jnp.float32).at[:, :, ::2, ::2].set(xm)
    xpad = jnp.pad(xu, ((0, 0), (0, 0), (2, 1), (2, 1)))
    k1d = jnp.array([1.0, 3.0, 3.0, 1.0]) / 4.0
    ref = sum(k1d[i] * k1d[j] * xpad[:, :, i:i + 16, j:j + 16]
              for i in range(4) for j in range(4))
    _assert_close(got, ref, 1e-4)

    # 4) blur + fused ToMask
    xb_t = jax.random.normal(jax.random.PRNGKey(13), (B, 8, 9, 9), jnp.float32)
    wmb = (0.3 * jax.random.normal(jax.random.PRNGKey(14), (1, 8), jnp.float32)
           ).astype(jnp.bfloat16)
    got_d, got_m = blur_tomask(xb_t, wmb, 1, 1)
    ref_d = fir_blur(xb_t, 1, 1)
    ref_m = jnp.einsum('oc,bchw->bohw', wmb.astype(jnp.float32),
                       ref_d.astype(jnp.bfloat16).astype(jnp.float32))
    _assert_close(got_d, ref_d, 1e-5)
    _assert_close(got_m, ref_m, 2e-3)

    # ---- full forward ----
    styles = [jax.random.normal(kz, (B, style_dim), jnp.float32)]
    feat = jax.random.normal(kf, (B, C0, size_start, size_start), jnp.float32)
    mask_in = jax.nn.sigmoid(jax.random.normal(km, (B, 1, size_start, size_start),
                                               jnp.float32))
    noise = [
        jax.random.normal(kn0, (B, C0, size_start, size_start), jnp.float32),
        jax.random.normal(kn1, (B, C0 * 2, size_start, size_start), jnp.float32),
        jax.random.normal(kn2, (B, C1, size, size), jnp.float32),
    ]

    fwd = jax.jit(functools.partial(generator_forward, params))
    images, masks, _ = fwd(styles, feat, mask_in, noise)
    jax.block_until_ready((images, masks))

    assert images[0].shape == (B, 3, size, size)
    assert masks[0].shape == (B, 1, size, size)
    assert bool(jnp.all(jnp.isfinite(images[0]))) and bool(jnp.all(jnp.isfinite(masks[0])))
    print("KERNEL_OK")
</pallas_src>

<mosaic_0001>
module attributes {stable_mosaic.version = 11 : i64} {
  func.func @k(%arg0: i32, %arg1: memref<8x128xf32, #tpu.memory_space<vmem>>, %arg2: memref<8x128xf32, #tpu.memory_space<vmem>>) attributes {dimension_semantics = [#tpu.dimension_semantics<arbitrary>], iteration_bounds = array<i64: 1>, scalar_prefetch = 0 : i64, scratch_operands = 0 : i64, tpu.core_type = #tpu.core_type<tc>, window_params = [{pipeline_mode = #tpu.pipeline_mode<synchronous>, transform_indices = @transform_0, window_bounds = array<i64: 8, 128>}, {pipeline_mode = #tpu.pipeline_mode<synchronous>, transform_indices = @transform_1, window_bounds = array<i64: 8, 128>}]} {
    %c0 = arith.constant 0 : index
    %c0_0 = arith.constant 0 : index
    %0 = vector.load %arg1[%c0, %c0_0] : memref<8x128xf32, #tpu.memory_space<vmem>>, vector<8x128xf32>
    %cst = arith.constant 1.000000e+00 : f32
    %1 = vector.broadcast %cst : f32 to vector<8x128xf32>
    %2 = arith.addf %0, %1 : vector<8x128xf32>
    %c0_1 = arith.constant 0 : index
    %c0_2 = arith.constant 0 : index
    %3 = vector.load %arg2[%c0_1, %c0_2] : memref<8x128xf32, #tpu.memory_space<vmem>>, vector<8x128xf32>
    tpu.vector_store %arg2[%c0_1, %c0_2], %2 {strides = array<i32>} : memref<8x128xf32, #tpu.memory_space<vmem>>, vector<8x128xf32>,
    return
  }
  func.func @transform_0(%arg0: i32) -> (i32, i32) {
    %c0_i32 = arith.constant 0 : i32
    %c0_i32_0 = arith.constant 0 : i32
    %c0_i32_1 = arith.constant 0 : i32
    return %c0_i32, %c0_i32_0 : i32, i32
  }
  func.func @transform_1(%arg0: i32) -> (i32, i32) {
    %c0_i32 = arith.constant 0 : i32
    %c0_i32_0 = arith.constant 0 : i32
    %c0_i32_1 = arith.constant 0 : i32
    return %c0_i32, %c0_i32_0 : i32, i32
  }
}

module attributes {stable_mosaic.version = 11 : i64} {
  func.func @_fused_layer_kernel(%arg0: i32, %arg1: memref<1x16x256xf32, #tpu.memory_space<vmem>>, %arg2: memref<1x16x256xf32, #tpu.memory_space<vmem>>, %arg3: memref<1x1x256xf32, #tpu.memory_space<vmem>>, %arg4: memref<1x32x1xf32, #tpu.memory_space<vmem>>, %arg5: memref<1x32x1xf32, #tpu.memory_space<vmem>>, %arg6: memref<9x32x32xbf16, #tpu.memory_space<vmem>>, %arg7: memref<1x32xbf16, #tpu.memory_space<vmem>>, %arg8: memref<1x32x1xf32, #tpu.memory_space<vmem>>, %arg9: memref<3x32xbf16, #tpu.memory_space<vmem>>, %arg10: memref<1x32x128xf32, #tpu.memory_space<vmem>>, %arg11: memref<1x1x128xf32, #tpu.memory_space<vmem>>, %arg12: memref<1x3x128xf32, #tpu.memory_space<vmem>>, %arg13: memref<32x256xbf16, #tpu.memory_space<vmem>>) attributes {dimension_semantics = [#tpu.dimension_semantics<parallel>], iteration_bounds = array<i64: 2>, scalar_prefetch = 0 : i64, scratch_operands = 1 : i64, tpu.core_type = #tpu.core_type<tc>, window_params = [{transform_indices = @transform_0, window_bounds = array<i64: 1, 16, 256>}, {transform_indices = @transform_1, window_bounds = array<i64: 1, 16, 256>}, {transform_indices = @transform_2, window_bounds = array<i64: 1, 1, 256>}, {transform_indices = @transform_3, window_bounds = array<i64: 1, 32, 1>}, {transform_indices = @transform_4, window_bounds = array<i64: 1, 32, 1>}, {pipeline_mode = #tpu.pipeline_mode<synchronous>, transform_indices = @transform_5, window_bounds = array<i64: 9, 32, 32>}, {pipeline_mode = #tpu.pipeline_mode<synchronous>, transform_indices = @transform_6, window_bounds = array<i64: 1, 32>}, {transform_indices = @transform_7, window_bounds = array<i64: 1, 32, 1>}, {pipeline_mode = #tpu.pipeline_mode<synchronous>, transform_indices = @transform_8, window_bounds = array<i64: 3, 32>}, {transform_indices = @transform_9, window_bounds = array<i64: 1, 32, 128>}, {transform_indices = @transform_10, window_bounds = array<i64: 1, 1, 128>}, {transform_indices = @transform_11, window_bounds = array<i64: 1, 3, 128>}]} {
    %c0 = arith.constant 0 : index
    %c0_0 = arith.constant 0 : index
    %c0_1 = arith.constant 0 : index
    %0 = vector.load %arg3[%c0, %c0_0, %c0_1] : memref<1x1x256xf32, #tpu.memory_space<vmem>>, vector<1x1x256xf32>
    %1 = vector.shape_cast %0 : vector<1x1x256xf32> to vector<1x256xf32>
    %c0_2 = arith.constant 0 : index
    %c0_3 = arith.constant 0 : index
    %c0_4 = arith.constant 0 : index
    %2 = vector.load %arg4[%c0_2, %c0_3, %c0_4] : memref<1x32x1xf32, #tpu.memory_space<vmem>>, vector<1x32x1xf32>
    %3 = vector.shape_cast %2 : vector<1x32x1xf32> to vector<32x1xf32>
    %c0_5 = arith.constant 0 : index
    %c0_6 = arith.constant 0 : index
    %c0_7 = arith.constant 0 : index
    %4 = vector.load %arg1[%c0_5, %c0_6, %c0_7] : memref<1x16x256xf32, #tpu.memory_space<vmem>>, vector<1x16x256xf32>
    %5 = vector.shape_cast %4 : vector<1x16x256xf32> to vector<16x256xf32>
    %6 = vector.broadcast %1 : vector<1x256xf32> to vector<16x256xf32>
    %7 = arith.mulf %6, %5 : vector<16x256xf32>
    %8 = vector.extract_strided_slice %3 {offsets = [0, 0], sizes = [16, 1], strides = [1, 1]} : vector<32x1xf32> to vector<16x1xf32>
    %9 = vector.broadcast %8 : vector<16x1xf32> to vector<16x256xf32>
    %10 = arith.mulf %7, %9 : vector<16x256xf32>
    %11 = arith.truncf %10 : vector<16x256xf32> to vector<16x256xbf16>
    %c0_8 = arith.constant 0 : index
    %c0_9 = arith.constant 0 : index
    %12 = vector.load %arg13[%c0_8, %c0_9] : memref<32x256xbf16, #tpu.memory_space<vmem>>, vector<16x256xbf16>
    tpu.vector_store %arg13[%c0_8, %c0_9], %11 {strides = array<i32>} : memref<32x256xbf16, #tpu.memory_space<vmem>>, vector<16x256xbf16>,
    %cst = arith.constant 1.000000e+00 : f32
    %13 = vector.broadcast %cst : f32 to vector<1x256xf32>
    %14 = arith.subf %13, %1 : vector<1x256xf32>
    %c0_10 = arith.constant 0 : index
    %c0_11 = arith.constant 0 : index
    %c0_12 = arith.constant 0 : index
    %15 = vector.load %arg2[%c0_10, %c0_11, %c0_12] : memref<1x16x256xf32, #tpu.memory_space<vmem>>, vector<1x16x256xf32>
    %16 = vector.shape_cast %15 : vector<1x16x256xf32> to vector<16x256xf32>
    %17 = vector.broadcast %14 : vector<1x256xf32> to vector<16x256xf32>
    %18 = arith.mulf %17, %16 : vector<16x256xf32>
    %19 = vector.extract_strided_slice %3 {offsets = [16, 0], sizes = [16, 1], strides = [1, 1]} : vector<32x1xf32> to vector<16x1xf32>
    %20 = vector.broadcast %19 : vector<16x1xf32> to vector<16x256xf32>
    %21 = arith.mulf %18, %20 : vector<16x256xf32>
    %22 = arith.truncf %21 : vector<16x256xf32> to vector<16x256xbf16>
    %c16 = arith.constant 16 : index
    %c0_13 = arith.constant 0 : index
    %23 = vector.load %arg13[%c16, %c0_13] : memref<32x256xbf16, #tpu.memory_space<vmem>>, vector<16x256xbf16>
    tpu.vector_store %arg13[%c16, %c0_13], %22 {strides = array<i32>} : memref<32x256xbf16, #tpu.memory_space<vmem>>, vector<16x256xbf16>,
    %c0_14 = arith.constant 0 : index
    %c0_15 = arith.constant 0 : index
    %c0_16 = arith.constant 0 : index
    %24 = vector.load %arg6[%c0_14, %c0_15, %c0_16] : memref<9x32x32xbf16, #tpu.memory_space<vmem>>, vector<1x32x32xbf16>
    %25 = vector.shape_cast %24 : vector<1x32x32xbf16> to vector<32x32xbf16>
    %c0_17 = arith.constant 0 : index
    %c0_18 = arith.constant 0 : index
    %26 = vector.load %arg13[%c0_17, %c0_18] : memref<32x256xbf16, #tpu.memory_space<vmem>>, vector<32x128xbf16>
    %cst_19 = arith.constant dense<0.000000e+00> : vector<32x128xf32>
    %27 = tpu.matmul %25, %26, %cst_19 {dimension_numbers = #tpu.dot_dimension_numbers<[1], [0], [0], [1], [0, 0, 1, 1], [], []>} : vector<32x32xbf16>, vector<32x128xbf16>, vector<32x128xf32> -> vector<32x128xf32>
    %c1 = arith.constant 1 : index
    %c0_20 = arith.constant 0 : index
    %c0_21 = arith.constant 0 : index
    %28 = vector.load %arg6[%c1, %c0_20, %c0_21] : memref<9x32x32xbf16, #tpu.memory_space<vmem>>, vector<1x32x32xbf16>
    %29 = vector.shape_cast %28 : vector<1x32x32xbf16> to vector<32x32xbf16>
    %c0_22 = arith.constant 0 : index
    %c1_23 = arith.constant 1 : index
    %30 = vector.load %arg13[%c0_22, %c1_23] : memref<32x256xbf16, #tpu.memory_space<vmem>>, vector<32x128xbf16>
    %cst_24 = arith.constant dense<0.000000e+00> : vector<32x128xf32>
    %31 = tpu.matmul %29, %30, %cst_24 {dimension_numbers = #tpu.dot_dimension_numbers<[1], [0], [0], [1], [0, 0, 1, 1], [], []>} : vector<32x32xbf16>, vector<32x128xbf16>, vector<32x128xf32> -> vector<32x128xf32>
    %32 = arith.addf %27, %31 : vector<32x128xf32>
    %c2 = arith.constant 2 : index
    %c0_25 = arith.constant 0 : index
    %c0_26 = arith.constant 0 : index
    %33 = vector.load %arg6[%c2, %c0_25, %c0_26] : memref<9x32x32xbf16, #tpu.memory_space<vmem>>, vector<1x32x32xbf16>
    %34 = vector.shape_cast %33 : vector<1x32x32xbf16> to vector<32x32xbf16>
    %c0_27 = arith.constant 0 : index
    %c2_28 = arith.constant 2 : index
    %35 = vector.load %arg13[%c0_27, %c2_28] : memref<32x256xbf16, #tpu.memory_space<vmem>>, vector<32x128xbf16>
    %cst_29 = arith.constant dense<0.000000e+00> : vector<32x128xf32>
    %36 = tpu.matmul %34, %35, %cst_29 {dimension_numbers = #tpu.dot_dimension_numbers<[1], [0], [0], [1], [0, 0, 1, 1], [], []>} : vector<32x32xbf16>, vector<32x128xbf16>, vector<32x128xf32> -> vector<32x128xf32>
    %37 = arith.addf %32, %36 : vector<32x128xf32>
    %c3 = arith.constant 3 : index
    %c0_30 = arith.constant 0 : index
    %c0_31 = arith.constant 0 : index
    %38 = vector.load %arg6[%c3, %c0_30, %c0_31] : memref<9x32x32xbf16, #tpu.memory_space<vmem>>, vector<1x32x32xbf16>
    %39 = vector.shape_cast %38 : vector<1x32x32xbf16> to vector<32x32xbf16>
    %c0_32 = arith.constant 0 : index
    %c10 = arith.constant 10 : index
    %40 = vector.load %arg13[%c0_32, %c10] : memref<32x256xbf16, #tpu.memory_space<vmem>>, vector<32x128xbf16>
    %cst_33 = arith.constant dense<0.000000e+00> : vector<32x128xf32>
    %41 = tpu.matmul %39, %40, %cst_33 {dimension_numbers = #tpu.dot_dimension_numbers<[1], [0], [0], [1], [0, 0, 1, 1], [], []>} : vector<32x32xbf16>, vector<32x128xbf16>, vector<32x128xf32> -> vector<32x128xf32>
    %42 = arith.addf %37, %41 : vector<32x128xf32>
    %c4 = arith.constant 4 : index
    %c0_34 = arith.constant 0 : index
    %c0_35 = arith.constant 0 : index
    %43 = vector.load %arg6[%c4, %c0_34, %c0_35] : memref<9x32x32xbf16, #tpu.memory_space<vmem>>, vector<1x32x32xbf16>
    %44 = vector.shape_cast %43 : vector<1x32x32xbf16> to vector<32x32xbf16>
    %c0_36 = arith.constant 0 : index
    %c11 = arith.constant 11 : index
    %45 = vector.load %arg13[%c0_36, %c11] : memref<32x256xbf16, #tpu.memory_space<vmem>>, vector<32x128xbf16>
    %cst_37 = arith.constant dense<0.000000e+00> : vector<32x128xf32>
    %46 = tpu.matmul %44, %45, %cst_37 {dimension_numbers = #tpu.dot_dimension_numbers<[1], [0], [0], [1], [0, 0, 1, 1], [], []>} : vector<32x32xbf16>, vector<32x128xbf16>, vector<32x128xf32> -> vector<32x128xf32>
    %47 = arith.addf %42, %46 : vector<32x128xf32>
    %c5 = arith.constant 5 : index
    %c0_38 = arith.constant 0 : index
    %c0_39 = arith.constant 0 : index
    %48 = vector.load %arg6[%c5, %c0_38, %c0_39] : memref<9x32x32xbf16, #tpu.memory_space<vmem>>, vector<1x32x32xbf16>
    %49 = vector.shape_cast %48 : vector<1x32x32xbf16> to vector<32x32xbf16>
    %c0_40 = arith.constant 0 : index
    %c12 = arith.constant 12 : index
    %50 = vector.load %arg13[%c0_40, %c12] : memref<32x256xbf16, #tpu.memory_space<vmem>>, vector<32x128xbf16>
    %cst_41 = arith.constant dense<0.000000e+00> : vector<32x128xf32>
    %51 = tpu.matmul %49, %50, %cst_41 {dimension_numbers = #tpu.dot_dimension_numbers<[1], [0], [0], [1], [0, 0, 1, 1], [], []>} : vector<32x32xbf16>, vector<32x128xbf16>, vector<32x128xf32> -> vector<32x128xf32>
    %52 = arith.addf %47, %51 : vector<32x128xf32>
    %c6 = arith.constant 6 : index
    %c0_42 = arith.constant 0 : index
    %c0_43 = arith.constant 0 : index
    %53 = vector.load %arg6[%c6, %c0_42, %c0_43] : memref<9x32x32xbf16, #tpu.memory_space<vmem>>, vector<1x32x32xbf16>
    %54 = vector.shape_cast %53 : vector<1x32x32xbf16> to vector<32x32xbf16>
    %c0_44 = arith.constant 0 : index
    %c20 = arith.constant 20 : index
    %55 = vector.load %arg13[%c0_44, %c20] : memref<32x256xbf16, #tpu.memory_space<vmem>>, vector<32x128xbf16>
    %cst_45 = arith.constant dense<0.000000e+00> : vector<32x128xf32>
    %56 = tpu.matmul %54, %55, %cst_45 {dimension_numbers = #tpu.dot_dimension_numbers<[1], [0], [0], [1], [0, 0, 1, 1], [], []>} : vector<32x32xbf16>, vector<32x128xbf16>, vector<32x128xf32> -> vector<32x128xf32>
    %57 = arith.addf %52, %56 : vector<32x128xf32>
    %c7 = arith.constant 7 : index
    %c0_46 = arith.constant 0 : index
    %c0_47 = arith.constant 0 : index
    %58 = vector.load %arg6[%c7, %c0_46, %c0_47] : memref<9x32x32xbf16, #tpu.memory_space<vmem>>, vector<1x32x32xbf16>
    %59 = vector.shape_cast %58 : vector<1x32x32xbf16> to vector<32x32xbf16>
    %c0_48 = arith.constant 0 : index
    %c21 = arith.constant 21 : index
    %60 = vector.load %arg13[%c0_48, %c21] : memref<32x256xbf16, #tpu.memory_space<vmem>>, vector<32x128xbf16>
    %cst_49 = arith.constant dense<0.000000e+00> : vector<32x128xf32>
    %61 = tpu.matmul %59, %60, %cst_49 {dimension_numbers = #tpu.dot_dimension_numbers<[1], [0], [0], [1], [0, 0, 1, 1], [], []>} : vector<32x32xbf16>, vector<32x128xbf16>, vector<32x128xf32> -> vector<32x128xf32>
    %62 = arith.addf %57, %61 : vector<32x128xf32>
    %c8 = arith.constant 8 : index
    %c0_50 = arith.constant 0 : index
    %c0_51 = arith.constant 0 : index
    %63 = vector.load %arg6[%c8, %c0_50, %c0_51] : memref<9x32x32xbf16, #tpu.memory_space<vmem>>, vector<1x32x32xbf16>
    %64 = vector.shape_cast %63 : vector<1x32x32xbf16> to vector<32x32xbf16>
    %c0_52 = arith.constant 0 : index
    %c22 = arith.constant 22 : index
    %65 = vector.load %arg13[%c0_52, %c22] : memref<32x256xbf16, #tpu.memory_space<vmem>>, vector<32x128xbf16>
    %cst_53 = arith.constant dense<0.000000e+00> : vector<32x128xf32>
    %66 = tpu.matmul %64, %65, %cst_53 {dimension_numbers = #tpu.dot_dimension_numbers<[1], [0], [0], [1], [0, 0, 1, 1], [], []>} : vector<32x32xbf16>, vector<32x128xbf16>, vector<32x128xf32> -> vector<32x128xf32>
    %67 = arith.addf %62, %66 : vector<32x128xf32>
    %c0_54 = arith.constant 0 : index
    %c0_55 = arith.constant 0 : index
    %c0_56 = arith.constant 0 : index
    %68 = vector.load %arg5[%c0_54, %c0_55, %c0_56] : memref<1x32x1xf32, #tpu.memory_space<vmem>>, vector<1x32x1xf32>
    %69 = vector.shape_cast %68 : vector<1x32x1xf32> to vector<32x1xf32>
    %70 = vector.broadcast %69 : vector<32x1xf32> to vector<32x128xf32>
    %71 = arith.mulf %67, %70 : vector<32x128xf32>
    %c0_57 = arith.constant 0 : index
    %c0_58 = arith.constant 0 : index
    %c0_59 = arith.constant 0 : index
    %72 = vector.load %arg10[%c0_57, %c0_58, %c0_59] : memref<1x32x128xf32, #tpu.memory_space<vmem>>, vector<1x32x128xf32>
    %73 = vector.shape_cast %72 : vector<1x32x128xf32> to vector<32x128xf32>
    %74 = vector.shape_cast %71 : vector<32x128xf32> to vector<1x32x128xf32>
    tpu.vector_store %arg10[%c0_57, %c0_58, %c0_59], %74 {strides = array<i32>} : memref<1x32x128xf32, #tpu.memory_space<vmem>>, vector<1x32x128xf32>,
    %75 = arith.truncf %71 : vector<32x128xf32> to vector<32x128xbf16>
    %c0_60 = arith.constant 0 : index
    %c0_61 = arith.constant 0 : index
    %76 = vector.load %arg7[%c0_60, %c0_61] : memref<1x32xbf16, #tpu.memory_space<vmem>>, vector<1x32xbf16>
    %cst_62 = arith.constant dense<0.000000e+00> : vector<1x128xf32>
    %77 = tpu.matmul %76, %75, %cst_62 {dimension_numbers = #tpu.dot_dimension_numbers<[1], [0], [0], [1], [0, 0, 1, 1], [], []>} : vector<1x32xbf16>, vector<32x128xbf16>, vector<1x128xf32> -> vector<1x128xf32>
    %c0_63 = arith.constant 0 : index
    %c0_64 = arith.constant 0 : index
    %c0_65 = arith.constant 0 : index
    %78 = vector.load %arg11[%c0_63, %c0_64, %c0_65] : memref<1x1x128xf32, #tpu.memory_space<vmem>>, vector<1x1x128xf32>
    %79 = vector.shape_cast %78 : vector<1x1x128xf32> to vector<1x128xf32>
    %80 = vector.shape_cast %77 : vector<1x128xf32> to vector<1x1x128xf32>
    tpu.vector_store %arg11[%c0_63, %c0_64, %c0_65], %80 {strides = array<i32>} : memref<1x1x128xf32, #tpu.memory_space<vmem>>, vector<1x1x128xf32>,
    %c0_66 = arith.constant 0 : index
    %c0_67 = arith.constant 0 : index
    %81 = vector.load %arg9[%c0_66, %c0_67] : memref<3x32xbf16, #tpu.memory_space<vmem>>, vector<3x32xbf16>
    %c0_68 = arith.constant 0 : index
    %c0_69 = arith.constant 0 : index
    %c0_70 = arith.constant 0 : index
    %82 = vector.load %arg8[%c0_68, %c0_69, %c0_70] : memref<1x32x1xf32, #tpu.memory_space<vmem>>, vector<1x32x1xf32>
    %83 = vector.shape_cast %82 : vector<1x32x1xf32> to vector<32x1xf32>
    %84 = vector.broadcast %83 : vector<32x1xf32> to vector<32x128xf32>
    %85 = arith.mulf %71, %84 : vector<32x128xf32>
    %86 = arith.truncf %85 : vector<32x128xf32> to vector<32x128xbf16>
    %cst_71 = arith.constant dense<0.000000e+00> : vector<3x128xf32>
    %87 = tpu.matmul %81, %86, %cst_71 {dimension_numbers = #tpu.dot_dimension_numbers<[1], [0], [0], [1], [0, 0, 1, 1], [], []>} : vector<3x32xbf16>, vector<32x128xbf16>, vector<3x128xf32> -> vector<3x128xf32>
    %c0_72 = arith.constant 0 : index
    %c0_73 = arith.constant 0 : index
    %c0_74 = arith.constant 0 : index
    %88 = vector.load %arg12[%c0_72, %c0_73, %c0_74] : memref<1x3x128xf32, #tpu.memory_space<vmem>>, vector<1x3x128xf32>
    %89 = vector.shape_cast %88 : vector<1x3x128xf32> to vector<3x128xf32>
    %90 = vector.shape_cast %87 : vector<3x128xf32> to vector<1x3x128xf32>
    tpu.vector_store %arg12[%c0_72, %c0_73, %c0_74], %90 {strides = array<i32>} : memref<1x3x128xf32, #tpu.memory_space<vmem>>, vector<1x3x128xf32>,
    return
  }
  func.func @transform_0(%arg0: i32) -> (i32, i32, i32) {
    %c0_i32 = arith.constant 0 : i32
    %c0_i32_0 = arith.constant 0 : i32
    %c0_i32_1 = arith.constant 0 : i32
    return %arg0, %c0_i32, %c0_i32_0 : i32, i32, i32
  }
  func.func @transform_1(%arg0: i32) -> (i32, i32, i32) {
    %c0_i32 = arith.constant 0 : i32
    %c0_i32_0 = arith.constant 0 : i32
    %c0_i32_1 = arith.constant 0 : i32
    return %arg0, %c0_i32, %c0_i32_0 : i32, i32, i32
  }
  func.func @transform_2(%arg0: i32) -> (i32, i32, i32) {
    %c0_i32 = arith.constant 0 : i32
    %c0_i32_0 = arith.constant 0 : i32
    %c0_i32_1 = arith.constant 0 : i32
    return %arg0, %c0_i32, %c0_i32_0 : i32, i32, i32
  }
  func.func @transform_3(%arg0: i32) -> (i32, i32, i32) {
    %c0_i32 = arith.constant 0 : i32
    %c0_i32_0 = arith.constant 0 : i32
    %c0_i32_1 = arith.constant 0 : i32
    return %arg0, %c0_i32, %c0_i32_0 : i32, i32, i32
  }
  func.func @transform_4(%arg0: i32) -> (i32, i32, i32) {
    %c0_i32 = arith.constant 0 : i32
    %c0_i32_0 = arith.constant 0 : i32
    %c0_i32_1 = arith.constant 0 : i32
    return %arg0, %c0_i32, %c0_i32_0 : i32, i32, i32
  }
  func.func @transform_5(%arg0: i32) -> (i32, i32, i32) {
    %c0_i32 = arith.constant 0 : i32
    %c0_i32_0 = arith.constant 0 : i32
    %c0_i32_1 = arith.constant 0 : i32
    %c0_i32_2 = arith.constant 0 : i32
    return %c0_i32, %c0_i32_0, %c0_i32_1 : i32, i32, i32
  }
  func.func @transform_6(%arg0: i32) -> (i32, i32) {
    %c0_i32 = arith.constant 0 : i32
    %c0_i32_0 = arith.constant 0 : i32
    %c0_i32_1 = arith.constant 0 : i32
    return %c0_i32, %c0_i32_0 : i32, i32
  }
  func.func @transform_7(%arg0: i32) -> (i32, i32, i32) {
    %c0_i32 = arith.constant 0 : i32
    %c0_i32_0 = arith.constant 0 : i32
    %c0_i32_1 = arith.constant 0 : i32
    return %arg0, %c0_i32, %c0_i32_0 : i32, i32, i32
  }
  func.func @transform_8(%arg0: i32) -> (i32, i32) {
    %c0_i32 = arith.constant 0 : i32
    %c0_i32_0 = arith.constant 0 : i32
    %c0_i32_1 = arith.constant 0 : i32
    return %c0_i32, %c0_i32_0 : i32, i32
  }
  func.func @transform_9(%arg0: i32) -> (i32, i32, i32) {
    %c0_i32 = arith.constant 0 : i32
    %c0_i32_0 = arith.constant 0 : i32
    %c0_i32_1 = arith.constant 0 : i32
    return %arg0, %c0_i32, %c0_i32_0 : i32, i32, i32
  }
  func.func @transform_10(%arg0: i32) -> (i32, i32, i32) {
    %c0_i32 = arith.constant 0 : i32
    %c0_i32_0 = arith.constant 0 : i32
    %c0_i32_1 = arith.constant 0 : i32
    return %arg0, %c0_i32, %c0_i32_0 : i32, i32, i32
  }
  func.func @transform_11(%arg0: i32) -> (i32, i32, i32) {
    %c0_i32 = arith.constant 0 : i32
    %c0_i32_0 = arith.constant 0 : i32
    %c0_i32_1 = arith.constant 0 : i32
    return %arg0, %c0_i32, %c0_i32_0 : i32, i32, i32
  }
}

</mosaic_0001>

<llo_original>
// kernel: tpu_custom_call.1
$region0: #{tpu_custom_call.1}
  #allocation0 [shape = 'u32[]', space=smem, size = 0x4, offset = 0x4, fixed_abs, tag = 'smem constant byte address 0x4 - core index']
  #allocation1 [shape = 'u32[144,128]{1,0:T(1,128)}', space=vmem, size = 0x12000, scoped, tag = 'internal scratch']
  %s0 = inlined_call_operand.hbm [shape: f32[8,128], index: 0, kind: input, shape index: {}]
  %s1 = inlined_call_operand.hbm [shape: f32[8,128], index: 1, kind: output, shape index: {}]
  %s2 = sld [smem:[#allocation0]]
  $region18: #{tpu_custom_call.1} parent=0
    _
  %s4 = ssub.s32 1, %s2
  %s5 = scalar_select 0, %s4, %s2
  $region1: #{tpu_custom_call.1} parent=0
    #allocation2 [shape = 'u8[4096]{0}', space=vmem, size = 0x1000, scoped, tag = 'input window, operand 0, single buffered']
    #allocation3 [shape = 's32[1]{0}', space=sflag, size = 0x4, scoped, tag = 'scoped memory for tpu_custom_call.1']
    #allocation4 [shape = 's32[1]{0}', space=sflag, size = 0x4, scoped, tag = 'scoped memory for tpu_custom_call.1']
    #allocation5 [shape = 'u8[4096]{0}', space=vmem, size = 0x1000, scoped, tag = 'output window, operand 0, single buffered']
    %6 = vsyncpa [#allocation3], 0
    %7 = vsyncpa [#allocation4], 0
    // Predicated region
    $region2: #{tpu_custom_call.1} parent=1 // pred_check
      _
    $region3: #{tpu_custom_call.1} parent=1 // pred_check_branch
      %9 = sbr.rel (0) target = $region5
    $region4: #{tpu_custom_call.1} parent=1 // pred_region
      %s11 = ssub.s32 128, 128
      %12 = vsyncadd [#allocation3], %s11
      %s14 = sshll.u32 [#allocation2], 4
      %s15 = int_to_ptr.vmem [resolvable:$true] %s14
      %17 = dma.hbm_to_vmem [thread:$0]  %s0, 128, %s15, [#allocation3]
    $region5: #{tpu_custom_call.1} parent=1 // pred_fallthru
      _
    // Predicated region
    $region6: #{tpu_custom_call.1} parent=1 // pred_check
      _
    $region7: #{tpu_custom_call.1} parent=1 // pred_check_branch
      %19 = sbr.rel (0) target = $region9
    $region8: #{tpu_custom_call.1} parent=1 // pred_region
      %20 = dma.done [#allocation3], 128
    $region9: #{tpu_custom_call.1} parent=1 // pred_fallthru
      _
    %v21 = vld [vmem:[#allocation2] sm:$0xff]
    %v22 = vadd.f32 %v21, 1.0
    %23 = vst [vmem:[#allocation5] sm:$0xff] %v22
    // Predicated region
    $region10: #{tpu_custom_call.1} parent=1 // pred_check
      _
    $region11: #{tpu_custom_call.1} parent=1 // pred_check_branch
      %25 = sbr.rel (0) target = $region13
    $region12: #{tpu_custom_call.1} parent=1 // pred_region
      %s27 = ssub.s32 128, 128
      %28 = vsyncadd [#allocation4], %s27
      %s30 = sshll.u32 [#allocation5], 4
      %s31 = int_to_ptr.vmem [resolvable:$true] %s30
      %33 = dma.vmem_to_hbm [thread:$0]  %s31, 128, %s1, [#allocation4]
    $region13: #{tpu_custom_call.1} parent=1 // pred_fallthru
      _
    // Predicated region
    $region14: #{tpu_custom_call.1} parent=1 // pred_check
      _
    $region15: #{tpu_custom_call.1} parent=1 // pred_check_branch
      %35 = sbr.rel (0) target = $region17
    $region16: #{tpu_custom_call.1} parent=1 // pred_region
      %36 = dma.done [#allocation4], 128
    $region17: #{tpu_custom_call.1} parent=1 // pred_fallthru
      _
    %37 = vsyncpa [#allocation3], 1
    %38 = vsyncpa [#allocation4], 1

// kernel: tpu_custom_call.1
$region0: #{tpu_custom_call.1}
  #allocation0 [shape = 'u32[]', space=smem, size = 0x4, offset = 0x4, fixed_abs, tag = 'smem constant byte address 0x4 - core index']
  #allocation1 [shape = 'u32[144,128]{1,0:T(1,128)}', space=vmem, size = 0x12000, scoped, tag = 'internal scratch']
  #allocation2 [shape = 'bf16[32,256]{1,0:T(8,128)(2,1)}', space=vmem, size = 0x4000, scoped, tag = 'scratch operand']
  %s0 = inlined_call_operand.hbm [shape: f32[2,16,256], index: 0, kind: input, shape index: {}]
  %s1 = inlined_call_operand.hbm [shape: f32[2,16,256], index: 1, kind: input, shape index: {}]
  %s2 = inlined_call_operand.vmem [shape: f32[2,1,256], index: 2, kind: input, shape index: {}]
  %s3 = inlined_call_operand.vmem [shape: f32[2,32,1], index: 3, kind: input, shape index: {}]
  %s4 = inlined_call_operand.vmem [shape: f32[2,32,1], index: 4, kind: input, shape index: {}]
  %s5 = inlined_call_operand.vmem [shape: bf16[9,32,32], index: 5, kind: input, shape index: {}]
  %s6 = inlined_call_operand.vmem [shape: bf16[1,32], index: 6, kind: input, shape index: {}]
  %s7 = inlined_call_operand.vmem [shape: f32[2,32,1], index: 7, kind: input, shape index: {}]
  %s8 = inlined_call_operand.vmem [shape: bf16[3,32], index: 8, kind: input, shape index: {}]
  %s9 = inlined_call_operand.hbm [shape: f32[2,32,128], index: 9, kind: output, shape index: {0}]
  %s10 = inlined_call_operand.hbm [shape: f32[2,1,128], index: 10, kind: output, shape index: {1}]
  %s11 = inlined_call_operand.vmem [shape: f32[2,3,128], index: 11, kind: output, shape index: {2}]
  %12 = xla_tuple %s9, %s10, %s11
  %s13 = sld [smem:[#allocation0]]
  $region93: #{tpu_custom_call.1} parent=0
    _
  %s15 = ssub.s32 1, %s13
  %s16 = scalar_select 0, %s15, %s13
  $region1: #{tpu_custom_call.1} parent=0
    #allocation3 [shape = 'u8[32768]{0}', space=vmem, size = 0x8000, scoped, tag = 'input window, operand 0']
    #allocation4 [shape = 's32[2]{0}', space=sflag, size = 0x8, scoped, tag = 'scoped memory for tpu_custom_call.1']
    #allocation5 [shape = 's32[2]{0}', space=sflag, size = 0x8, scoped, tag = 'scoped memory for tpu_custom_call.1']
    #allocation6 [shape = 'u8[32768]{0}', space=vmem, size = 0x8000, scoped, tag = 'input window, operand 1']
    #allocation7 [shape = 's32[2]{0}', space=sflag, size = 0x8, scoped, tag = 'scoped memory for tpu_custom_call.1']
    #allocation8 [shape = 'u8[32768]{0}', space=vmem, size = 0x8000, scoped, tag = 'output window, operand 0']
    #allocation9 [shape = 'u8[1024]{0}', space=vmem, size = 0x400, scoped, tag = 'output window, operand 1']
    #allocation10 [shape = 's32[2]{0}', space=sflag, size = 0x8, scoped, tag = 'scoped memory for tpu_custom_call.1']
    %17 = vsyncpa [#allocation4], 0
    %s18 = scalar_lea.sflag [#allocation4], 1
    %19 = vsyncpa %s18, 0
    %20 = vsyncpa [#allocation7], 0
    %s21 = scalar_lea.sflag [#allocation7], 1
    %22 = vsyncpa %s21, 0
    %23 = vsyncpa [#allocation5], 0
    %s24 = scalar_lea.sflag [#allocation5], 1
    %25 = vsyncpa %s24, 0
    %26 = vsyncpa [#allocation10], 0
    %s27 = scalar_lea.sflag [#allocation10], 1
    %28 = vsyncpa %s27, 0
    loop: start=0, step=1, limit=4
    $region2: #{tpu_custom_call.1} parent=1 // loop_pre_header
      _
    $region3: #{tpu_custom_call.1} parent=1 // loop_header
      %s30 = sphi 0, %s34
      %p31 = scmp.ge.s32.totalorder %s30, 4
      %s40 = sphi 0, %s42
      %s43 = sphi 0, %s40
      %s44 = sphi 0, %s43
      %s60 = sphi 0, %s44
      %s66 = sphi 0, %s68
      %s69 = sphi 0, %s66
      %s70 = sphi 0, %s69
      %s86 = sphi 0, %s70
      %s92 = sphi 0, %s94
      %s95 = sphi 0, %s92
      %s96 = sphi 0, %s95
      %s112 = sphi 0, %s96
      %s118 = sphi 0, %s120
      %s121 = sphi 0, %s118
      %s122 = sphi 0, %s121
      %s138 = sphi 0, %s122
      %s144 = sphi 0, %s146
      %s147 = sphi 0, %s144
      %s148 = sphi 0, %s147
      %s164 = sphi 0, %s148
      %s168 = sphi 0, %s168
      %s170 = sphi 0, %s168
      %s171 = sphi 0, %s170
      %s185 = sphi 0, %s171
      %s189 = sphi 0, %s189
      %s191 = sphi 0, %s189
      %s192 = sphi 0, %s191
      %s206 = sphi 0, %s192
      %s212 = sphi 0, %s214
      %s215 = sphi 0, %s212
      %s216 = sphi 0, %s215
      %s232 = sphi 0, %s216
      %s236 = sphi 0, %s236
      %s238 = sphi 0, %s236
      %s239 = sphi 0, %s238
      %s253 = sphi 0, %s239
      %s259 = sphi 0, %s261
      %s262 = sphi 0, %s259
      %s263 = sphi 0, %s262
      %s279 = sphi 0, %s263
      %s285 = sphi 0, %s287
      %s288 = sphi 0, %s285
      %s289 = sphi 0, %s288
      %s305 = sphi 0, %s289
      %s311 = sphi 0, %s313
      %s314 = sphi 0, %s311
      %s315 = sphi 0, %s314
      %s331 = sphi 0, %s315
    $region4: #{tpu_custom_call.1} parent=1 // loop_header_branch
      %33 = sbr.rel (%p31) target = $region8
    $region5: #{tpu_custom_call.1} parent=1 // loop_body
      %s35 = ssub.s32 %s30, 1
      %s36 = ssub.s32 %s30, 2
      %s37 = sadd.s32 %s30, 1
      %s38 = ssub.s32 %s30, %s37
      %p39 = scmp.eq.s32.totalorder %s38, 0
      %s41 = sadd.s32 %s40, 1
      %s42 = scalar_select %p39, %s40, %s41
      %p45 = pneg %p39
      %p46 = scmp.eq.s32.totalorder %s30, 1
      %p47 = por %p45, %p46
      %p48 = scmp.ne.s32.totalorder %s40, %s43
      %p49 = scmp.eq.s32.totalorder %s30, 0
      %p50 = por %p48, %p49
      %p51 = scmp.ne.s32.totalorder %s40, %s43
      %p52 = scmp.eq.s32.totalorder %s35, 1
      %p53 = por %p51, %p52
      %p54 = scmp.ne.s32.totalorder %s43, %s44
      %p55 = scmp.eq.s32.totalorder %s35, 0
      %p56 = por %p54, %p55
      %p57 = scmp.ne.s32.totalorder %s43, %s44
      %p58 = scmp.eq.s32.totalorder %s36, 1
      %p59 = por %p57, %p58
      %p61 = scmp.ne.s32.totalorder %s44, %s60
      %p62 = scmp.eq.s32.totalorder %s36, 0
      %p63 = por %p61, %p62
      %s64 = ssub.s32 %s30, %s37
      %p65 = scmp.eq.s32.totalorder %s64, 0
      %s67 = sadd.s32 %s66, 1
      %s68 = scalar_select %p65, %s66, %s67
      %p71 = pneg %p65
      %p72 = scmp.eq.s32.totalorder %s30, 1
      %p73 = por %p71, %p72
      %p74 = scmp.ne.s32.totalorder %s66, %s69
      %p75 = scmp.eq.s32.totalorder %s30, 0
      %p76 = por %p74, %p75
      %p77 = scmp.ne.s32.totalorder %s66, %s69
      %p78 = scmp.eq.s32.totalorder %s35, 1
      %p79 = por %p77, %p78
      %p80 = scmp.ne.s32.totalorder %s69, %s70
      %p81 = scmp.eq.s32.totalorder %s35, 0
      %p82 = por %p80, %p81
      %p83 = scmp.ne.s32.totalorder %s69, %s70
      %p84 = scmp.eq.s32.totalorder %s36, 1
      %p85 = por %p83, %p84
      %p87 = scmp.ne.s32.totalorder %s70, %s86
      %p88 = scmp.eq.s32.totalorder %s36, 0
      %p89 = por %p87, %p88
      %s90 = ssub.s32 %s30, %s37
      %p91 = scmp.eq.s32.totalorder %s90, 0
      %s93 = sadd.s32 %s92, 1
      %s94 = scalar_select %p91, %s92, %s93
      %p97 = pneg %p91
      %p98 = scmp.eq.s32.totalorder %s30, 1
      %p99 = por %p97, %p98
      %p100 = scmp.ne.s32.totalorder %s92, %s95
      %p101 = scmp.eq.s32.totalorder %s30, 0
      %p102 = por %p100, %p101
      %p103 = scmp.ne.s32.totalorder %s92, %s95
      %p104 = scmp.eq.s32.totalorder %s35, 1
      %p105 = por %p103, %p104
      %p106 = scmp.ne.s32.totalorder %s95, %s96
      %p107 = scmp.eq.s32.totalorder %s35, 0
      %p108 = por %p106, %p107
      %p109 = scmp.ne.s32.totalorder %s95, %s96
      %p110 = scmp.eq.s32.totalorder %s36, 1
      %p111 = por %p109, %p110
      %p113 = scmp.ne.s32.totalorder %s96, %s112
      %p114 = scmp.eq.s32.totalorder %s36, 0
      %p115 = por %p113, %p114
      %s116 = ssub.s32 %s30, %s37
      %p117 = scmp.eq.s32.totalorder %s116, 0
      %s119 = sadd.s32 %s118, 1
      %s120 = scalar_select %p117, %s118, %s119
      %p123 = pneg %p117
      %p124 = scmp.eq.s32.totalorder %s30, 1
      %p125 = por %p123, %p124
      %p126 = scmp.ne.s32.totalorder %s118, %s121
      %p127 = scmp.eq.s32.totalorder %s30, 0
      %p128 = por %p126, %p127
      %p129 = scmp.ne.s32.totalorder %s118, %s121
      %p130 = scmp.eq.s32.totalorder %s35, 1
      %p131 = por %p129, %p130
      %p132 = scmp.ne.s32.totalorder %s121, %s122
      %p133 = scmp.eq.s32.totalorder %s35, 0
      %p134 = por %p132, %p133
      %p135 = scmp.ne.s32.totalorder %s121, %s122
      %p136 = scmp.eq.s32.totalorder %s36, 1
      %p137 = por %p135, %p136
      %p139 = scmp.ne.s32.totalorder %s122, %s138
      %p140 = scmp.eq.s32.totalorder %s36, 0
      %p141 = por %p139, %p140
      %s142 = ssub.s32 %s30, %s37
      %p143 = scmp.eq.s32.totalorder %s142, 0
      %s145 = sadd.s32 %s144, 1
      %s146 = scalar_select %p143, %s144, %s145
      %p149 = pneg %p143
      %p150 = scmp.eq.s32.totalorder %s30, 1
      %p151 = por %p149, %p150
      %p152 = scmp.ne.s32.totalorder %s144, %s147
      %p153 = scmp.eq.s32.totalorder %s30, 0
      %p154 = por %p152, %p153
      %p155 = scmp.ne.s32.totalorder %s144, %s147
      %p156 = scmp.eq.s32.totalorder %s35, 1
      %p157 = por %p155, %p156
      %p158 = scmp.ne.s32.totalorder %s147, %s148
      %p159 = scmp.eq.s32.totalorder %s35, 0
      %p160 = por %p158, %p159
      %p161 = scmp.ne.s32.totalorder %s147, %s148
      %p162 = scmp.eq.s32.totalorder %s36, 1
      %p163 = por %p161, %p162
      %p165 = scmp.ne.s32.totalorder %s148, %s164
      %p166 = scmp.eq.s32.totalorder %s36, 0
      %p167 = por %p165, %p166
      %s169 = sadd.s32 %s168, 1
      %p172 = scmp.eq.s32.totalorder %s30, 1
      %p173 = scmp.ne.s32.totalorder %s168, %s170
      %p174 = scmp.eq.s32.totalorder %s30, 0
      %p175 = por %p173, %p174
      %p176 = scmp.ne.s32.totalorder %s168, %s170
      %p177 = scmp.eq.s32.totalorder %s35, 1
      %p178 = por %p176, %p177
      %p179 = scmp.ne.s32.totalorder %s170, %s171
      %p180 = scmp.eq.s32.totalorder %s35, 0
      %p181 = por %p179, %p180
      %p182 = scmp.ne.s32.totalorder %s170, %s171
      %p183 = scmp.eq.s32.totalorder %s36, 1
      %p184 = por %p182, %p183
      %p186 = scmp.ne.s32.totalorder %s171, %s185
      %p187 = scmp.eq.s32.totalorder %s36, 0
      %p188 = por %p186, %p187
      %s190 = sadd.s32 %s189, 1
      %p193 = scmp.eq.s32.totalorder %s30, 1
      %p194 = scmp.ne.s32.totalorder %s189, %s191
      %p195 = scmp.eq.s32.totalorder %s30, 0
      %p196 = por %p194, %p195
      %p197 = scmp.ne.s32.totalorder %s189, %s191
      %p198 = scmp.eq.s32.totalorder %s35, 1
      %p199 = por %p197, %p198
      %p200 = scmp.ne.s32.totalorder %s191, %s192
      %p201 = scmp.eq.s32.totalorder %s35, 0
      %p202 = por %p200, %p201
      %p203 = scmp.ne.s32.totalorder %s191, %s192
      %p204 = scmp.eq.s32.totalorder %s36, 1
      %p205 = por %p203, %p204
      %p207 = scmp.ne.s32.totalorder %s192, %s206
      %p208 = scmp.eq.s32.totalorder %s36, 0
      %p209 = por %p207, %p208
      %s210 = ssub.s32 %s30, %s37
      %p211 = scmp.eq.s32.totalorder %s210, 0
      %s213 = sadd.s32 %s212, 1
      %s214 = scalar_select %p211, %s212, %s213
      %p217 = pneg %p211
      %p218 = scmp.eq.s32.totalorder %s30, 1
      %p219 = por %p217, %p218
      %p220 = scmp.ne.s32.totalorder %s212, %s215
      %p221 = scmp.eq.s32.totalorder %s30, 0
      %p222 = por %p220, %p221
      %p223 = scmp.ne.s32.totalorder %s212, %s215
      %p224 = scmp.eq.s32.totalorder %s35, 1
      %p225 = por %p223, %p224
      %p226 = scmp.ne.s32.totalorder %s215, %s216
      %p227 = scmp.eq.s32.totalorder %s35, 0
      %p228 = por %p226, %p227
      %p229 = scmp.ne.s32.totalorder %s215, %s216
      %p230 = scmp.eq.s32.totalorder %s36, 1
      %p231 = por %p229, %p230
      %p233 = scmp.ne.s32.totalorder %s216, %s232
      %p234 = scmp.eq.s32.totalorder %s36, 0
      %p235 = por %p233, %p234
      %s237 = sadd.s32 %s236, 1
      %p240 = scmp.eq.s32.totalorder %s30, 1
      %p241 = scmp.ne.s32.totalorder %s236, %s238
      %p242 = scmp.eq.s32.totalorder %s30, 0
      %p243 = por %p241, %p242
      %p244 = scmp.ne.s32.totalorder %s236, %s238
      %p245 = scmp.eq.s32.totalorder %s35, 1
      %p246 = por %p244, %p245
      %p247 = scmp.ne.s32.totalorder %s238, %s239
      %p248 = scmp.eq.s32.totalorder %s35, 0
      %p249 = por %p247, %p248
      %p250 = scmp.ne.s32.totalorder %s238, %s239
      %p251 = scmp.eq.s32.totalorder %s36, 1
      %p252 = por %p250, %p251
      %p254 = scmp.ne.s32.totalorder %s239, %s253
      %p255 = scmp.eq.s32.totalorder %s36, 0
      %p256 = por %p254, %p255
      %s257 = ssub.s32 %s30, %s37
      %p258 = scmp.eq.s32.totalorder %s257, 0
      %s260 = sadd.s32 %s259, 1
      %s261 = scalar_select %p258, %s259, %s260
      %p264 = pneg %p258
      %p265 = scmp.eq.s32.totalorder %s30, 1
      %p266 = por %p264, %p265
      %p267 = scmp.ne.s32.totalorder %s259, %s262
      %p268 = scmp.eq.s32.totalorder %s30, 0
      %p269 = por %p267, %p268
      %p270 = scmp.ne.s32.totalorder %s259, %s262
      %p271 = scmp.eq.s32.totalorder %s35, 1
      %p272 = por %p270, %p271
      %p273 = scmp.ne.s32.totalorder %s262, %s263
      %p274 = scmp.eq.s32.totalorder %s35, 0
      %p275 = por %p273, %p274
      %p276 = scmp.ne.s32.totalorder %s262, %s263
      %p277 = scmp.eq.s32.totalorder %s36, 1
      %p278 = por %p276, %p277
      %p280 = scmp.ne.s32.totalorder %s263, %s279
      %p281 = scmp.eq.s32.totalorder %s36, 0
      %p282 = por %p280, %p281
      %s283 = ssub.s32 %s30, %s37
      %p284 = scmp.eq.s32.totalorder %s283, 0
      %s286 = sadd.s32 %s285, 1
      %s287 = scalar_select %p284, %s285, %s286
      %p290 = pneg %p284
      %p291 = scmp.eq.s32.totalorder %s30, 1
      %p292 = por %p290, %p291
      %p293 = scmp.ne.s32.totalorder %s285, %s288
      %p294 = scmp.eq.s32.totalorder %s30, 0
      %p295 = por %p293, %p294
      %p296 = scmp.ne.s32.totalorder %s285, %s288
      %p297 = scmp.eq.s32.totalorder %s35, 1
      %p298 = por %p296, %p297
      %p299 = scmp.ne.s32.totalorder %s288, %s289
      %p300 = scmp.eq.s32.totalorder %s35, 0
      %p301 = por %p299, %p300
      %p302 = scmp.ne.s32.totalorder %s288, %s289
      %p303 = scmp.eq.s32.totalorder %s36, 1
      %p304 = por %p302, %p303
      %p306 = scmp.ne.s32.totalorder %s289, %s305
      %p307 = scmp.eq.s32.totalorder %s36, 0
      %p308 = por %p306, %p307
      %s309 = ssub.s32 %s30, %s37
      %p310 = scmp.eq.s32.totalorder %s309, 0
      %s312 = sadd.s32 %s311, 1
      %s313 = scalar_select %p310, %s311, %s312
      %p316 = pneg %p310
      %p317 = scmp.eq.s32.totalorder %s30, 1
      %p318 = por %p316, %p317
      %p319 = scmp.ne.s32.totalorder %s311, %s314
      %p320 = scmp.eq.s32.totalorder %s30, 0
      %p321 = por %p319, %p320
      %p322 = scmp.ne.s32.totalorder %s311, %s314
      %p323 = scmp.eq.s32.totalorder %s35, 1
      %p324 = por %p322, %p323
      %p325 = scmp.ne.s32.totalorder %s314, %s315
      %p326 = scmp.eq.s32.totalorder %s35, 0
      %p327 = por %p325, %p326
      %p328 = scmp.ne.s32.totalorder %s314, %s315
      %p329 = scmp.eq.s32.totalorder %s36, 1
      %p330 = por %p328, %p329
      %p332 = scmp.ne.s32.totalorder %s315, %s331
      %p333 = scmp.eq.s32.totalorder %s36, 0
      %p334 = por %p332, %p333
      %p335 = scmp.le.s32.totalorder 1, %s30
      %p336 = scmp.lt.s32.totalorder %s30, 3
      %p337 = pnand %p335, %p336
      %p338 = pneg %p337
      // Predicated region
      $region9: #{tpu_custom_call.1} parent=5 // pred_check
        _
      $region10: #{tpu_custom_call.1} parent=5 // pred_check_branch
        %340 = sbr.rel (%p337) target = $region12
      $region11: #{tpu_custom_call.1} parent=5 // pred_region
        %s341 = ssub.s32 %s30, 1
        // Predicated region
        $region13: #{tpu_custom_call.1} parent=11 // pred_check
          %p342 = pneg %p181
        $region14: #{tpu_custom_call.1} parent=11 // pred_check_branch
          %344 = sbr.rel (%p342) target = $region16
        $region15: #{tpu_custom_call.1} parent=11 // pred_region
          _
        $region16: #{tpu_custom_call.1} parent=11 // pred_fallthru
          _
        // Predicated region
        $region17: #{tpu_custom_call.1} parent=11 // pred_check
          %p345 = pneg %p202
        $region18: #{tpu_custom_call.1} parent=11 // pred_check_branch
          %347 = sbr.rel (%p345) target = $region20
        $region19: #{tpu_custom_call.1} parent=11 // pred_region
          _
        $region20: #{tpu_custom_call.1} parent=11 // pred_fallthru
          _
        // Predicated region
        $region21: #{tpu_custom_call.1} parent=11 // pred_check
          %p348 = pneg %p249
        $region22: #{tpu_custom_call.1} parent=11 // pred_check_branch
          %350 = sbr.rel (%p348) target = $region24
        $region23: #{tpu_custom_call.1} parent=11 // pred_region
          _
        $region24: #{tpu_custom_call.1} parent=11 // pred_fallthru
          _
      $region12: #{tpu_custom_call.1} parent=5 // pred_fallthru
        _
      %p351 = scmp.lt.s32.totalorder %s30, 2
      // Predicated region
      $region25: #{tpu_custom_call.1} parent=5 // pred_check
        %p352 = pneg %p351
      $region26: #{tpu_custom_call.1} parent=5 // pred_check_branch
        %354 = sbr.rel (%p352) target = $region28
      $region27: #{tpu_custom_call.1} parent=5 // pred_region
        // Predicated region
        $region29: #{tpu_custom_call.1} parent=27 // pred_check
          %p355 = pneg %p50
        $region30: #{tpu_custom_call.1} parent=27 // pred_check_branch
          %357 = sbr.rel (%p355) target = $region32
        $region31: #{tpu_custom_call.1} parent=27 // pred_region
          %s358 = sand.u32 %s40, 1
          %s359 = scalar_lea.sflag [#allocation4], %s358
          %s360 = sand.u32 %s40, 1
          %s361 = smul.addr %s360, 32
          %s362 = scalar_lea.vmem [#allocation3], %s361
          %s364 = ssub.s32 512, 512
          %365 = vsyncadd %s359, %s364
          %s366 = smul.addr %s30, 4
          %s367 = smul.addr %s366, 128
          %s368 = scalar_lea.hbm %s0, %s367
          %s369 = sshll.u32 %s362, 4
          %s370 = int_to_ptr.vmem [resolvable:$true] %s369
          %375 = dma.hbm_to_vmem [thread:$0]  %s368, 512, %s370, %s359, 256, 256, 16
        $region32: #{tpu_custom_call.1} parent=27 // pred_fallthru
          _
        // Predicated region
        $region33: #{tpu_custom_call.1} parent=27 // pred_check
          %p376 = pneg %p76
        $region34: #{tpu_custom_call.1} parent=27 // pred_check_branch
          %378 = sbr.rel (%p376) target = $region36
        $region35: #{tpu_custom_call.1} parent=27 // pred_region
          %s379 = sand.u32 %s66, 1
          %s380 = scalar_lea.sflag [#allocation7], %s379
          %s381 = sand.u32 %s66, 1
          %s382 = smul.addr %s381, 32
          %s383 = scalar_lea.vmem [#allocation6], %s382
          %s385 = ssub.s32 512, 512
          %386 = vsyncadd %s380, %s385
          %s387 = smul.addr %s30, 4
          %s388 = smul.addr %s387, 128
          %s389 = scalar_lea.hbm %s1, %s388
          %s390 = sshll.u32 %s383, 4
          %s391 = int_to_ptr.vmem [resolvable:$true] %s390
          %396 = dma.hbm_to_vmem [thread:$0]  %s389, 512, %s391, %s380, 256, 256, 16
        $region36: #{tpu_custom_call.1} parent=27 // pred_fallthru
          _
        // Predicated region
        $region37: #{tpu_custom_call.1} parent=27 // pred_check
          %p397 = pneg %p102
        $region38: #{tpu_custom_call.1} parent=27 // pred_check_branch
          %399 = sbr.rel (%p397) target = $region40
        $region39: #{tpu_custom_call.1} parent=27 // pred_region
          %p400 = scmp.lt.s32.totalorder %s30, 1
          %s401 = scalar_select %p400, %s30, 1
          %s402 = smul.addr %s401, 2
          %s403 = scalar_lea.vmem %s2, %s402
        $region40: #{tpu_custom_call.1} parent=27 // pred_fallthru
          _
        // Predicated region
        $region41: #{tpu_custom_call.1} parent=27 // pred_check
          %p404 = pneg %p128
        $region42: #{tpu_custom_call.1} parent=27 // pred_check_branch
          %406 = sbr.rel (%p404) target = $region44
        $region43: #{tpu_custom_call.1} parent=27 // pred_region
          %p407 = scmp.lt.s32.totalorder %s30, 1
          %s408 = scalar_select %p407, %s30, 1
          %s409 = smul.addr %s408, 4
          %s410 = smul.addr %s409, 8
          %s411 = scalar_lea.vmem %s3, %s410
        $region44: #{tpu_custom_call.1} parent=27 // pred_fallthru
          _
        // Predicated region
        $region45: #{tpu_custom_call.1} parent=27 // pred_check
          %p412 = pneg %p154
        $region46: #{tpu_custom_call.1} parent=27 // pred_check_branch
          %414 = sbr.rel (%p412) target = $region48
        $region47: #{tpu_custom_call.1} parent=27 // pred_region
          %p415 = scmp.lt.s32.totalorder %s30, 1
          %s416 = scalar_select %p415, %s30, 1
          %s417 = smul.addr %s416, 4
          %s418 = smul.addr %s417, 8
          %s419 = scalar_lea.vmem %s4, %s418
        $region48: #{tpu_custom_call.1} parent=27 // pred_fallthru
          _
        // Predicated region
        $region49: #{tpu_custom_call.1} parent=27 // pred_check
          %p420 = pneg %p222
        $region50: #{tpu_custom_call.1} parent=27 // pred_check_branch
          %422 = sbr.rel (%p420) target = $region52
        $region51: #{tpu_custom_call.1} parent=27 // pred_region
          %p423 = scmp.lt.s32.totalorder %s30, 1
          %s424 = scalar_select %p423, %s30, 1
          %s425 = smul.addr %s424, 4
          %s426 = smul.addr %s425, 8
          %s427 = scalar_lea.vmem %s7, %s426
        $region52: #{tpu_custom_call.1} parent=27 // pred_fallthru
          _
      $region28: #{tpu_custom_call.1} parent=5 // pred_fallthru
        _
      %p428 = scmp.le.s32.totalorder 1, %s30
      %p429 = scmp.lt.s32.totalorder %s30, 3
      %p430 = pnand %p428, %p429
      %p431 = pneg %p430
      // Predicated region
      $region53: #{tpu_custom_call.1} parent=5 // pred_check
        _
      $region54: #{tpu_custom_call.1} parent=5 // pred_check_branch
        %433 = sbr.rel (%p430) target = $region56
      $region55: #{tpu_custom_call.1} parent=5 // pred_region
        %s434 = ssub.s32 %s30, 1
        %s435 = sand.u32 %s43, 1
        %s436 = scalar_lea.sflag [#allocation4], %s435
        %s437 = sand.u32 %s43, 1
        %s438 = smul.addr %s437, 32
        %s439 = scalar_lea.vmem [#allocation3], %s438
        // Predicated region
        $region57: #{tpu_custom_call.1} parent=55 // pred_check
          %p440 = pneg %p56
        $region58: #{tpu_custom_call.1} parent=55 // pred_check_branch
          %442 = sbr.rel (%p440) target = $region60
        $region59: #{tpu_custom_call.1} parent=55 // pred_region
          %443 = dma.done %s436, 512
        $region60: #{tpu_custom_call.1} parent=55 // pred_fallthru
          _
        %s444 = sand.u32 %s69, 1
        %s445 = scalar_lea.sflag [#allocation7], %s444
        %s446 = sand.u32 %s69, 1
        %s447 = smul.addr %s446, 32
        %s448 = scalar_lea.vmem [#allocation6], %s447
        // Predicated region
        $region61: #{tpu_custom_call.1} parent=55 // pred_check
          %p449 = pneg %p82
        $region62: #{tpu_custom_call.1} parent=55 // pred_check_branch
          %451 = sbr.rel (%p449) target = $region64
        $region63: #{tpu_custom_call.1} parent=55 // pred_region
          %452 = dma.done %s445, 512
        $region64: #{tpu_custom_call.1} parent=55 // pred_fallthru
          _
        %s453 = sand.u32 %s43, 1
        %s454 = scalar_lea.sflag [#allocation4], %s453
        %s455 = sand.u32 %s43, 1
        %s456 = smul.addr %s455, 32
        %s457 = scalar_lea.vmem [#allocation3], %s456
        %p458 = pneg %p56
        %p459 = pneg %p53
        %s460 = sand.u32 %s69, 1
        %s461 = scalar_lea.sflag [#allocation7], %s460
        %s462 = sand.u32 %s69, 1
        %s463 = smul.addr %s462, 32
        %s464 = scalar_lea.vmem [#allocation6], %s463
        %p465 = pneg %p82
        %p466 = pneg %p79
        %p467 = scmp.lt.s32.totalorder %s35, 1
        %s468 = scalar_select %p467, %s35, 1
        %s469 = smul.addr %s468, 2
        %s470 = scalar_lea.vmem %s2, %s469
        %p471 = pneg %p108
        %p472 = pneg %p105
        %p473 = scmp.lt.s32.totalorder %s35, 1
        %s474 = scalar_select %p473, %s35, 1
        %s475 = smul.addr %s474, 4
        %s476 = smul.addr %s475, 8
        %s477 = scalar_lea.vmem %s3, %s476
        %p478 = pneg %p134
        %p479 = pneg %p131
        %p480 = scmp.lt.s32.totalorder %s35, 1
        %s481 = scalar_select %p480, %s35, 1
        %s482 = smul.addr %s481, 4
        %s483 = smul.addr %s482, 8
        %s484 = scalar_lea.vmem %s4, %s483
        %p485 = pneg %p160
        %p486 = pneg %p157
        %p487 = pneg %p181
        %p488 = pneg %p178
        %p489 = pneg %p202
        %p490 = pneg %p199
        %p491 = scmp.lt.s32.totalorder %s35, 1
        %s492 = scalar_select %p491, %s35, 1
        %s493 = smul.addr %s492, 4
        %s494 = smul.addr %s493, 8
        %s495 = scalar_lea.vmem %s7, %s494
        %p496 = pneg %p228
        %p497 = pneg %p225
        %p498 = pneg %p249
        %p499 = pneg %p246
        %p500 = pneg %p275
        %p501 = pneg %p272
        %s502 = sand.u32 %s262, 1
        %s503 = scalar_lea.sflag [#allocation5], %s502
        %s504 = sand.u32 %s262, 1
        %s505 = smul.addr %s504, 32
        %s506 = scalar_lea.vmem [#allocation8], %s505
        %p507 = pneg %p301
        %p508 = pneg %p298
        %s509 = sand.u32 %s288, 1
        %s510 = scalar_lea.sflag [#allocation10], %s509
        %s511 = sand.u32 %s288, 1
        %s512 = scalar_lea.vmem [#allocation9], %s511
        %p513 = pneg %p327
        %p514 = pneg %p324
        %p515 = scmp.lt.s32.totalorder %s35, 1
        %s516 = scalar_select %p515, %s35, 1
        %s517 = smul.addr %s516, 4
        %s518 = scalar_lea.vmem %s11, %s517
        %p519 = scmp.lt.s32.totalorder %s35, 1
        %s520 = scalar_select %p519, %s35, 1
        %s521 = smul.addr %s520, 2
        %s522 = scalar_lea.vmem %s2, %s521
        %p523 = scmp.lt.s32.totalorder %s35, 1
        %s524 = scalar_select %p523, %s35, 1
        %s525 = smul.addr %s524, 4
        %s526 = smul.addr %s525, 8
        %s527 = scalar_lea.vmem %s3, %s526
        %p528 = scmp.lt.s32.totalorder %s35, 1
        %s529 = scalar_select %p528, %s35, 1
        %s530 = smul.addr %s529, 4
        %s531 = smul.addr %s530, 8
        %s532 = scalar_lea.vmem %s4, %s531
        %p533 = scmp.lt.s32.totalorder %s35, 1
        %s534 = scalar_select %p533, %s35, 1
        %s535 = smul.addr %s534, 4
        %s536 = smul.addr %s535, 8
        %s537 = scalar_lea.vmem %s7, %s536
        %p538 = scmp.lt.s32.totalorder %s35, 1
        %s539 = scalar_select %p538, %s35, 1
        %s540 = smul.addr %s539, 4
        %s541 = scalar_lea.vmem %s11, %s540
        %v543 = vld [vmem:[%s522] sm:$0x3]
        %v544 = vld [vmem:[%s527] sm:$0xff]
        %v545 = vld [vmem:[%s527 + $0x8] sm:$0xff]
        %v546 = vld [vmem:[%s527 + $0x10] sm:$0xff]
        %v547 = vld [vmem:[%s527 + $0x18] sm:$0xff]
        %v548 = vld [vmem:[%s439] sm:$0xff]
        %v549 = vld [vmem:[%s439 + $0x8] sm:$0xff]
        %v550 = vld [vmem:[%s439 + $0x10] sm:$0xff]
        %v551 = vld [vmem:[%s439 + $0x18] sm:$0xff]
        %v553 = vlaneseq
        %v554 = vshrl.u32 %v553, 7
        %v555 = vsub.s32 0, %v554
        %v556 = vrot.slane %v543, %v555
        %v557 = vlaneseq
        %v558 = vshrl.u32 %v557, 7
        %v559 = vsub.s32 1, %v558
        %v560 = vrot.slane %v543, %v559
        %v563 = vmul.f32 %v556, %v548
        %v564 = vmul.f32 %v560, %v549
        %v565 = vmul.f32 %v556, %v550
        %v566 = vmul.f32 %v560, %v551
        %568 = vset.pattern.permute.xlu0 0
        %569 = vperm.xlu0 %568, %v544
        %v570 = vpop.permute.xlu0 %569
        %573 = vset.pattern.permute.xlu0 0
        %574 = vperm.xlu0 %573, %v545
        %v575 = vpop.permute.xlu0 %574
        %v577 = vmul.f32 %v563, %v570
        %v578 = vmul.f32 %v564, %v570
        %v579 = vmul.f32 %v565, %v575
        %v580 = vmul.f32 %v566, %v575
        %v581 = vpack.c.bf16 %v579, %v577
        %v582 = vpack.c.bf16 %v580, %v578
        %v585 = vunpack.c.l.b16 %v581
        %v586 = vunpack.c.l.b16 %v582
        %v587 = vunpack.c.h.b16 %v581
        %v588 = vunpack.c.h.b16 %v582
        %v589 = vpack.c.b16 %v586, %v585
        %v590 = vpack.c.b16 %v588, %v587
        %593 = vst [vmem:[#allocation2] sm:$0xff] %v589
        %594 = vst [vmem:[#allocation2 + $0x8] sm:$0xff] %v590
        %v595 = vsub.f32 1.0, %v543
        %v596 = vld [vmem:[%s448] sm:$0xff]
        %v597 = vld [vmem:[%s448 + $0x8] sm:$0xff]
        %v598 = vld [vmem:[%s448 + $0x10] sm:$0xff]
        %v599 = vld [vmem:[%s448 + $0x18] sm:$0xff]
        %v601 = vlaneseq
        %v602 = vshrl.u32 %v601, 7
        %v603 = vsub.s32 0, %v602
        %v604 = vrot.slane %v595, %v603
        %v605 = vlaneseq
        %v606 = vshrl.u32 %v605, 7
        %v607 = vsub.s32 1, %v606
        %v608 = vrot.slane %v595, %v607
        %v611 = vmul.f32 %v604, %v596
        %v612 = vmul.f32 %v608, %v597
        %v613 = vmul.f32 %v604, %v598
        %v614 = vmul.f32 %v608, %v599
        %616 = vset.pattern.permute.xlu0 0
        %617 = vperm.xlu0 %616, %v546
        %v618 = vpop.permute.xlu0 %617
        %621 = vset.pattern.permute.xlu0 0
        %622 = vperm.xlu0 %621, %v547
        %v623 = vpop.permute.xlu0 %622
        %v625 = vmul.f32 %v611, %v618
        %v626 = vmul.f32 %v612, %v618
        %v627 = vmul.f32 %v613, %v623
        %v628 = vmul.f32 %v614, %v623
        %v629 = vpack.c.bf16 %v627, %v625
        %v630 = vpack.c.bf16 %v628, %v626
        %v633 = vunpack.c.l.b16 %v629
        %v634 = vunpack.c.l.b16 %v630
        %v635 = vunpack.c.h.b16 %v629
        %v636 = vunpack.c.h.b16 %v630
        %v637 = vpack.c.b16 %v634, %v633
        %v638 = vpack.c.b16 %v636, %v635
        %641 = vst [vmem:[#allocation2 + $0x10] sm:$0xff] %v637
        %642 = vst [vmem:[#allocation2 + $0x18] sm:$0xff] %v638
        %v643 = vld [vmem:[%s5] sm:$0xf]
        %v644 = vld [vmem:[%s5 + $0x4] sm:$0xf]
        %v645 = vld [vmem:[%s5 + $0x8] sm:$0xf]
        %v646 = vld [vmem:[%s5 + $0xc] sm:$0xf]
        %v647 = vld [vmem:[#allocation2] sm:$0xf]
        %v648 = vld [vmem:[#allocation2 + $0x8] sm:$0xf]
        %v649 = vld [vmem:[#allocation2 + $0x10] sm:$0xf]
        %v650 = vld [vmem:[#allocation2 + $0x18] sm:$0xf]
        %s651 = scalar_lea.vmem %s5, 16
        %v652 = vld [vmem:[%s651] sm:$0xf]
        %v653 = vld [vmem:[%s651 + $0x4] sm:$0xf]
        %v654 = vld [vmem:[%s651 + $0x8] sm:$0xf]
        %v655 = vld [vmem:[%s651 + $0xc] sm:$0xf]
        %v656 = vld [vmem:[#allocation2] sm:$0xff]
        %v657 = vld [vmem:[#allocation2 + $0x8] sm:$0xff]
        %v658 = vld [vmem:[#allocation2 + $0x10] sm:$0xff]
        %v659 = vld [vmem:[#allocation2 + $0x18] sm:$0xff]
        %v664 = vunpack.c.l.b16 %v652
        %v665 = vunpack.c.l.b16 %v653
        %v666 = vunpack.c.l.b16 %v654
        %v667 = vunpack.c.l.b16 %v655
        %v668 = vpack.c.b16 %v665, %v664
        %v669 = vpack.c.b16 %v667, %v666
        %v674 = vunpack.c.l.b16 %v656
        %v675 = vunpack.c.h.b16 %v656
        %v676 = vunpack.c.l.b16 %v657
        %v677 = vunpack.c.h.b16 %v657
        %v678 = vunpack.c.l.b16 %v658
        %v679 = vunpack.c.h.b16 %v658
        %v680 = vunpack.c.l.b16 %v659
        %v681 = vunpack.c.h.b16 %v659
        %v682 = vpack.c.b16 %v676, %v674
        %v683 = vpack.c.b16 %v677, %v675
        %v684 = vpack.c.b16 %v680, %v678
        %v685 = vpack.c.b16 %v681, %v679
        %686 = vrot.lane.b32.xlu0 %v682, 127
        %v687 = vpop.permute.xlu0 %686
        %688 = vrot.lane.b32.xlu0 %v683, 127
        %v689 = vpop.permute.xlu0 %688
        %690 = vrot.lane.b32.xlu0 %v684, 127
        %v691 = vpop.permute.xlu0 %690
        %692 = vrot.lane.b32.xlu0 %v685, 127
        %v693 = vpop.permute.xlu0 %692
        %vm694 = vcmask 1039360
        %v695 = vsel %vm694, %v687, %v689
        %v696 = vsel %vm694, %v691, %v693
        %vm699 = vcmask 261120
        %v701 = vsel %vm699, %v668, 0
        %v704 = vsel %vm699, %v669, 0
        %706 = vmatprep.subr.bf16.mxu0 0
        %707 = vmatpush1.bf16.msra.mxu0 0
        %708 = vmatprep.subr.bf16.mxu0 0
        %709 = vmatpush1.bf16.msra.mxu0 0
        %710 = vmatprep.subr.bf16.mxu0 0
        %711 = vmatpush1.bf16.msra.mxu0 0
        %712 = vmatprep.subr.bf16.mxu0 0
        %713 = vmatpush1.bf16.msra.mxu0 0
        %714 = vmatprep.subr.bf16.mxu0 0
        %715 = vmatpush1.bf16.msra.mxu0 0
        %716 = vmatprep.subr.bf16.mxu0 0
        %717 = vmatpush1.bf16.msra.mxu0 0
        %718 = vmatprep.subr.bf16.mxu0 0
        %719 = vmatpush1.bf16.msra.mxu0 %v696
        %720 = vmatprep.subr.bf16.mxu0 0
        %721 = vmatpush1.bf16.msra.mxu0 %v695
        %722 = vmatprep.subr.bf16.mxu0 0
        %723 = vmatpush2.bf16.msra.mxu0 0
        %724 = vmatprep.subr.bf16.mxu0 0
        %725 = vmatpush2.bf16.msra.mxu0 0
        %726 = vmatprep.subr.bf16.mxu0 0
        %727 = vmatpush2.bf16.msra.mxu0 0
        %728 = vmatprep.subr.bf16.mxu0 0
        %729 = vmatpush2.bf16.msra.mxu0 0
        %730 = vmatprep.subr.bf16.mxu0 0
        %731 = vmatpush2.bf16.msra.mxu0 0
        %732 = vmatprep.subr.bf16.mxu0 0
        %733 = vmatpush2.bf16.msra.mxu0 0
        %734 = vmatprep.subr.bf16.mxu0 0
        %735 = vmatpush2.bf16.msra.mxu0 0
        %736 = vmatprep.subr.bf16.mxu0 0
        %737 = vmatpush2.bf16.msra.mxu0 0
        %738 = vmatprep.mubr.bf16.mxu0 0
        %739 = vmatmul.mubr.bf16.gmra.mxu0 %v701
        %v740 = vpop.f32.mrf.mxu0
        %v741 = vadd.f32 0.0, %v740
        %v742 = vpop.f32.mrf.mxu0
        %v743 = vpop.f32.mrf.mxu0
        %v744 = vadd.f32 0.0, %v743
        %v745 = vpop.f32.mrf.mxu0
        %746 = vmatprep.mubr.bf16.mxu0 0
        %747 = vmatmul.mubr.bf16.gmra.mxu0 %v704
        %v748 = vpop.f32.mrf.mxu0
        %v749 = vadd.f32 0.0, %v748
        %v750 = vpop.f32.mrf.mxu0
        %v751 = vpop.f32.mrf.mxu0
        %v752 = vadd.f32 0.0, %v751
        %v753 = vpop.f32.mrf.mxu0
        %754 = vdwg.mxu0
        %v759 = vunpack.c.l.b16 %v643
        %v760 = vunpack.c.l.b16 %v644
        %v761 = vunpack.c.l.b16 %v645
        %v762 = vunpack.c.l.b16 %v646
        %v763 = vpack.c.b16 %v760, %v759
        %v764 = vpack.c.b16 %v762, %v761
        %v769 = vunpack.c.l.b16 %v647
        %v770 = vunpack.c.l.b16 %v648
        %v771 = vunpack.c.l.b16 %v649
        %v772 = vunpack.c.l.b16 %v650
        %v773 = vpack.c.b16 %v770, %v769
        %v774 = vpack.c.b16 %v772, %v771
        %v778 = vsel %vm699, %v763, 0
        %v781 = vsel %vm699, %v764, 0
        %783 = vmatprep.subr.bf16.mxu0 0
        %784 = vmatpush1.bf16.msra.mxu0 0
        %785 = vmatprep.subr.bf16.mxu0 0
        %786 = vmatpush1.bf16.msra.mxu0 0
        %787 = vmatprep.subr.bf16.mxu0 0
        %788 = vmatpush1.bf16.msra.mxu0 0
        %789 = vmatprep.subr.bf16.mxu0 0
        %790 = vmatpush1.bf16.msra.mxu0 0
        %791 = vmatprep.subr.bf16.mxu0 0
        %792 = vmatpush1.bf16.msra.mxu0 0
        %793 = vmatprep.subr.bf16.mxu0 0
        %794 = vmatpush1.bf16.msra.mxu0 0
        %795 = vmatprep.subr.bf16.mxu0 0
        %796 = vmatpush1.bf16.msra.mxu0 %v774
        %797 = vmatprep.subr.bf16.mxu0 0
        %798 = vmatpush1.bf16.msra.mxu0 %v773
        %799 = vmatprep.subr.bf16.mxu0 0
        %800 = vmatpush2.bf16.msra.mxu0 0
        %801 = vmatprep.subr.bf16.mxu0 0
        %802 = vmatpush2.bf16.msra.mxu0 0
        %803 = vmatprep.subr.bf16.mxu0 0
        %804 = vmatpush2.bf16.msra.mxu0 0
        %805 = vmatprep.subr.bf16.mxu0 0
        %806 = vmatpush2.bf16.msra.mxu0 0
        %807 = vmatprep.subr.bf16.mxu0 0
        %808 = vmatpush2.bf16.msra.mxu0 0
        %809 = vmatprep.subr.bf16.mxu0 0
        %810 = vmatpush2.bf16.msra.mxu0 0
        %811 = vmatprep.subr.bf16.mxu0 0
        %812 = vmatpush2.bf16.msra.mxu0 0
        %813 = vmatprep.subr.bf16.mxu0 0
        %814 = vmatpush2.bf16.msra.mxu0 0
        %815 = vmatprep.mubr.bf16.mxu0 0
        %816 = vmatmul.mubr.bf16.gmra.mxu0 %v778
        %v817 = vpop.f32.mrf.mxu0
        %v818 = vadd.f32 %v741, %v817
        %v819 = vpop.f32.mrf.mxu0
        %v820 = vpop.f32.mrf.mxu0
        %v821 = vadd.f32 %v744, %v820
        %v822 = vpop.f32.mrf.mxu0
        %823 = vmatprep.mubr.bf16.mxu0 0
        %824 = vmatmul.mubr.bf16.gmra.mxu0 %v781
        %v825 = vpop.f32.mrf.mxu0
        %v826 = vadd.f32 %v749, %v825
        %v827 = vpop.f32.mrf.mxu0
        %v828 = vpop.f32.mrf.mxu0
        %v829 = vadd.f32 %v752, %v828
        %v830 = vpop.f32.mrf.mxu0
        %831 = vdwg.mxu0
        %s832 = scalar_lea.vmem %s5, 32
        %v833 = vld [vmem:[%s832] sm:$0xf]
        %v834 = vld [vmem:[%s832 + $0x4] sm:$0xf]
        %v835 = vld [vmem:[%s832 + $0x8] sm:$0xf]
        %v836 = vld [vmem:[%s832 + $0xc] sm:$0xf]
        %v841 = vunpack.c.l.b16 %v833
        %v842 = vunpack.c.l.b16 %v834
        %v843 = vunpack.c.l.b16 %v835
        %v844 = vunpack.c.l.b16 %v836
        %v845 = vpack.c.b16 %v842, %v841
        %v846 = vpack.c.b16 %v844, %v843
        %847 = vrot.lane.b32.xlu0 %v682, 126
        %v848 = vpop.permute.xlu0 %847
        %849 = vrot.lane.b32.xlu0 %v683, 126
        %v850 = vpop.permute.xlu0 %849
        %851 = vrot.lane.b32.xlu0 %v684, 126
        %v852 = vpop.permute.xlu0 %851
        %853 = vrot.lane.b32.xlu0 %v685, 126
        %v854 = vpop.permute.xlu0 %853
        %vm855 = vcmask 1031168
        %v856 = vsel %vm855, %v848, %v850
        %v857 = vsel %vm855, %v852, %v854
        %v861 = vsel %vm699, %v845, 0
        %v864 = vsel %vm699, %v846, 0
        %866 = vmatprep.subr.bf16.mxu0 0
        %867 = vmatpush1.bf16.msra.mxu0 0
        %868 = vmatprep.subr.bf16.mxu0 0
        %869 = vmatpush1.bf16.msra.mxu0 0
        %870 = vmatprep.subr.bf16.mxu0 0
        %871 = vmatpush1.bf16.msra.mxu0 0
        %872 = vmatprep.subr.bf16.mxu0 0
        %873 = vmatpush1.bf16.msra.mxu0 0
        %874 = vmatprep.subr.bf16.mxu0 0
        %875 = vmatpush1.bf16.msra.mxu0 0
        %876 = vmatprep.subr.bf16.mxu0 0
        %877 = vmatpush1.bf16.msra.mxu0 0
        %878 = vmatprep.subr.bf16.mxu0 0
        %879 = vmatpush1.bf16.msra.mxu0 %v857
        %880 = vmatprep.subr.bf16.mxu0 0
        %881 = vmatpush1.bf16.msra.mxu0 %v856
        %882 = vmatprep.subr.bf16.mxu0 0
        %883 = vmatpush2.bf16.msra.mxu0 0
        %884 = vmatprep.subr.bf16.mxu0 0
        %885 = vmatpush2.bf16.msra.mxu0 0
        %886 = vmatprep.subr.bf16.mxu0 0
        %887 = vmatpush2.bf16.msra.mxu0 0
        %888 = vmatprep.subr.bf16.mxu0 0
        %889 = vmatpush2.bf16.msra.mxu0 0
        %890 = vmatprep.subr.bf16.mxu0 0
        %891 = vmatpush2.bf16.msra.mxu0 0
        %892 = vmatprep.subr.bf16.mxu0 0
        %893 = vmatpush2.bf16.msra.mxu0 0
        %894 = vmatprep.subr.bf16.mxu0 0
        %895 = vmatpush2.bf16.msra.mxu0 0
        %896 = vmatprep.subr.bf16.mxu0 0
        %897 = vmatpush2.bf16.msra.mxu0 0
        %898 = vmatprep.mubr.bf16.mxu0 0
        %899 = vmatmul.mubr.bf16.gmra.mxu0 %v861
        %v900 = vpop.f32.mrf.mxu0
        %v901 = vadd.f32 0.0, %v900
        %v902 = vpop.f32.mrf.mxu0
        %v903 = vpop.f32.mrf.mxu0
        %v904 = vadd.f32 0.0, %v903
        %v905 = vpop.f32.mrf.mxu0
        %906 = vmatprep.mubr.bf16.mxu0 0
        %907 = vmatmul.mubr.bf16.gmra.mxu0 %v864
        %v908 = vpop.f32.mrf.mxu0
        %v909 = vadd.f32 0.0, %v908
        %v910 = vpop.f32.mrf.mxu0
        %v911 = vpop.f32.mrf.mxu0
        %v912 = vadd.f32 0.0, %v911
        %v913 = vpop.f32.mrf.mxu0
        %914 = vdwg.mxu0
        %v915 = vadd.f32 %v818, %v901
        %v916 = vadd.f32 %v821, %v904
        %v917 = vadd.f32 %v826, %v909
        %v918 = vadd.f32 %v829, %v912
        %s919 = scalar_lea.vmem %s5, 48
        %v920 = vld [vmem:[%s919] sm:$0xf]
        %v921 = vld [vmem:[%s919 + $0x4] sm:$0xf]
        %v922 = vld [vmem:[%s919 + $0x8] sm:$0xf]
        %v923 = vld [vmem:[%s919 + $0xc] sm:$0xf]
        %v928 = vunpack.c.l.b16 %v920
        %v929 = vunpack.c.l.b16 %v921
        %v930 = vunpack.c.l.b16 %v922
        %v931 = vunpack.c.l.b16 %v923
        %v932 = vpack.c.b16 %v929, %v928
        %v933 = vpack.c.b16 %v931, %v930
        %934 = vrot.lane.b32.xlu0 %v682, 118
        %v935 = vpop.permute.xlu0 %934
        %936 = vrot.lane.b32.xlu0 %v683, 118
        %v937 = vpop.permute.xlu0 %936
        %938 = vrot.lane.b32.xlu0 %v684, 118
        %v939 = vpop.permute.xlu0 %938
        %940 = vrot.lane.b32.xlu0 %v685, 118
        %v941 = vpop.permute.xlu0 %940
        %vm942 = vcmask 965632
        %v943 = vsel %vm942, %v935, %v937
        %v944 = vsel %vm942, %v939, %v941
        %v948 = vsel %vm699, %v932, 0
        %v951 = vsel %vm699, %v933, 0
        %953 = vmatprep.subr.bf16.mxu0 0
        %954 = vmatpush1.bf16.msra.mxu0 0
        %955 = vmatprep.subr.bf16.mxu0 0
        %956 = vmatpush1.bf16.msra.mxu0 0
        %957 = vmatprep.subr.bf16.mxu0 0
        %958 = vmatpush1.bf16.msra.mxu0 0
        %959 = vmatprep.subr.bf16.mxu0 0
        %960 = vmatpush1.bf16.msra.mxu0 0
        %961 = vmatprep.subr.bf16.mxu0 0
        %962 = vmatpush1.bf16.msra.mxu0 0
        %963 = vmatprep.subr.bf16.mxu0 0
        %964 = vmatpush1.bf16.msra.mxu0 0
        %965 = vmatprep.subr.bf16.mxu0 0
        %966 = vmatpush1.bf16.msra.mxu0 %v944
        %967 = vmatprep.subr.bf16.mxu0 0
        %968 = vmatpush1.bf16.msra.mxu0 %v943
        %969 = vmatprep.subr.bf16.mxu0 0
        %970 = vmatpush2.bf16.msra.mxu0 0
        %971 = vmatprep.subr.bf16.mxu0 0
        %972 = vmatpush2.bf16.msra.mxu0 0
        %973 = vmatprep.subr.bf16.mxu0 0
        %974 = vmatpush2.bf16.msra.mxu0 0
        %975 = vmatprep.subr.bf16.mxu0 0
        %976 = vmatpush2.bf16.msra.mxu0 0
        %977 = vmatprep.subr.bf16.mxu0 0
        %978 = vmatpush2.bf16.msra.mxu0 0
        %979 = vmatprep.subr.bf16.mxu0 0
        %980 = vmatpush2.bf16.msra.mxu0 0
        %981 = vmatprep.subr.bf16.mxu0 0
        %982 = vmatpush2.bf16.msra.mxu0 0
        %983 = vmatprep.subr.bf16.mxu0 0
        %984 = vmatpush2.bf16.msra.mxu0 0
        %985 = vmatprep.mubr.bf16.mxu0 0
        %986 = vmatmul.mubr.bf16.gmra.mxu0 %v948
        %v987 = vpop.f32.mrf.mxu0
        %v988 = vadd.f32 0.0, %v987
        %v989 = vpop.f32.mrf.mxu0
        %v990 = vpop.f32.mrf.mxu0
        %v991 = vadd.f32 0.0, %v990
        %v992 = vpop.f32.mrf.mxu0
        %993 = vmatprep.mubr.bf16.mxu0 0
        %994 = vmatmul.mubr.bf16.gmra.mxu0 %v951
        %v995 = vpop.f32.mrf.mxu0
        %v996 = vadd.f32 0.0, %v995
        %v997 = vpop.f32.mrf.mxu0
        %v998 = vpop.f32.mrf.mxu0
        %v999 = vadd.f32 0.0, %v998
        %v1000 = vpop.f32.mrf.mxu0
        %1001 = vdwg.mxu0
        %v1002 = vadd.f32 %v915, %v988
        %v1003 = vadd.f32 %v916, %v991
        %v1004 = vadd.f32 %v917, %v996
        %v1005 = vadd.f32 %v918, %v999
        %s1006 = scalar_lea.vmem %s5, 64
        %v1007 = vld [vmem:[%s1006] sm:$0xf]
        %v1008 = vld [vmem:[%s1006 + $0x4] sm:$0xf]
        %v1009 = vld [vmem:[%s1006 + $0x8] sm:$0xf]
        %v1010 = vld [vmem:[%s1006 + $0xc] sm:$0xf]
        %v1015 = vunpack.c.l.b16 %v1007
        %v1016 = vunpack.c.l.b16 %v1008
        %v1017 = vunpack.c.l.b16 %v1009
        %v1018 = vunpack.c.l.b16 %v1010
        %v1019 = vpack.c.b16 %v1016, %v1015
        %v1020 = vpack.c.b16 %v1018, %v1017
        %1021 = vrot.lane.b32.xlu0 %v682, 117
        %v1022 = vpop.permute.xlu0 %1021
        %1023 = vrot.lane.b32.xlu0 %v683, 117
        %v1024 = vpop.permute.xlu0 %1023
        %1025 = vrot.lane.b32.xlu0 %v684, 117
        %v1026 = vpop.permute.xlu0 %1025
        %1027 = vrot.lane.b32.xlu0 %v685, 117
        %v1028 = vpop.permute.xlu0 %1027
        %vm1029 = vcmask 957440
        %v1030 = vsel %vm1029, %v1022, %v1024
        %v1031 = vsel %vm1029, %v1026, %v1028
        %v1035 = vsel %vm699, %v1019, 0
        %v1038 = vsel %vm699, %v1020, 0
        %1040 = vmatprep.subr.bf16.mxu0 0
        %1041 = vmatpush1.bf16.msra.mxu0 0
        %1042 = vmatprep.subr.bf16.mxu0 0
        %1043 = vmatpush1.bf16.msra.mxu0 0
        %1044 = vmatprep.subr.bf16.mxu0 0
        %1045 = vmatpush1.bf16.msra.mxu0 0
        %1046 = vmatprep.subr.bf16.mxu0 0
        %1047 = vmatpush1.bf16.msra.mxu0 0
        %1048 = vmatprep.subr.bf16.mxu0 0
        %1049 = vmatpush1.bf16.msra.mxu0 0
        %1050 = vmatprep.subr.bf16.mxu0 0
        %1051 = vmatpush1.bf16.msra.mxu0 0
        %1052 = vmatprep.subr.bf16.mxu0 0
        %1053 = vmatpush1.bf16.msra.mxu0 %v1031
        %1054 = vmatprep.subr.bf16.mxu0 0
        %1055 = vmatpush1.bf16.msra.mxu0 %v1030
        %1056 = vmatprep.subr.bf16.mxu0 0
        %1057 = vmatpush2.bf16.msra.mxu0 0
        %1058 = vmatprep.subr.bf16.mxu0 0
        %1059 = vmatpush2.bf16.msra.mxu0 0
        %1060 = vmatprep.subr.bf16.mxu0 0
        %1061 = vmatpush2.bf16.msra.mxu0 0
        %1062 = vmatprep.subr.bf16.mxu0 0
        %1063 = vmatpush2.bf16.msra.mxu0 0
        %1064 = vmatprep.subr.bf16.mxu0 0
        %1065 = vmatpush2.bf16.msra.mxu0 0
        %1066 = vmatprep.subr.bf16.mxu0 0
        %1067 = vmatpush2.bf16.msra.mxu0 0
        %1068 = vmatprep.subr.bf16.mxu0 0
        %1069 = vmatpush2.bf16.msra.mxu0 0
        %1070 = vmatprep.subr.bf16.mxu0 0
        %1071 = vmatpush2.bf16.msra.mxu0 0
        %1072 = vmatprep.mubr.bf16.mxu0 0
        %1073 = vmatmul.mubr.bf16.gmra.mxu0 %v1035
        %v1074 = vpop.f32.mrf.mxu0
        %v1075 = vadd.f32 0.0, %v1074
        %v1076 = vpop.f32.mrf.mxu0
        %v1077 = vpop.f32.mrf.mxu0
        %v1078 = vadd.f32 0.0, %v1077
        %v1079 = vpop.f32.mrf.mxu0
        %1080 = vmatprep.mubr.bf16.mxu0 0
        %1081 = vmatmul.mubr.bf16.gmra.mxu0 %v1038
        %v1082 = vpop.f32.mrf.mxu0
        %v1083 = vadd.f32 0.0, %v1082
        %v1084 = vpop.f32.mrf.mxu0
        %v1085 = vpop.f32.mrf.mxu0
        %v1086 = vadd.f32 0.0, %v1085
        %v1087 = vpop.f32.mrf.mxu0
        %1088 = vdwg.mxu0
        %v1089 = vadd.f32 %v1002, %v1075
        %v1090 = vadd.f32 %v1003, %v1078
        %v1091 = vadd.f32 %v1004, %v1083
        %v1092 = vadd.f32 %v1005, %v1086
        %s1093 = scalar_lea.vmem %s5, 80
        %v1094 = vld [vmem:[%s1093] sm:$0xf]
        %v1095 = vld [vmem:[%s1093 + $0x4] sm:$0xf]
        %v1096 = vld [vmem:[%s1093 + $0x8] sm:$0xf]
        %v1097 = vld [vmem:[%s1093 + $0xc] sm:$0xf]
        %v1102 = vunpack.c.l.b16 %v1094
        %v1103 = vunpack.c.l.b16 %v1095
        %v1104 = vunpack.c.l.b16 %v1096
        %v1105 = vunpack.c.l.b16 %v1097
        %v1106 = vpack.c.b16 %v1103, %v1102
        %v1107 = vpack.c.b16 %v1105, %v1104
        %1108 = vrot.lane.b32.xlu0 %v682, 116
        %v1109 = vpop.permute.xlu0 %1108
        %1110 = vrot.lane.b32.xlu0 %v683, 116
        %v1111 = vpop.permute.xlu0 %1110
        %1112 = vrot.lane.b32.xlu0 %v684, 116
        %v1113 = vpop.permute.xlu0 %1112
        %1114 = vrot.lane.b32.xlu0 %v685, 116
        %v1115 = vpop.permute.xlu0 %1114
        %vm1116 = vcmask 949248
        %v1117 = vsel %vm1116, %v1109, %v1111
        %v1118 = vsel %vm1116, %v1113, %v1115
        %v1122 = vsel %vm699, %v1106, 0
        %v1125 = vsel %vm699, %v1107, 0
        %1127 = vmatprep.subr.bf16.mxu0 0
        %1128 = vmatpush1.bf16.msra.mxu0 0
        %1129 = vmatprep.subr.bf16.mxu0 0
        %1130 = vmatpush1.bf16.msra.mxu0 0
        %1131 = vmatprep.subr.bf16.mxu0 0
        %1132 = vmatpush1.bf16.msra.mxu0 0
        %1133 = vmatprep.subr.bf16.mxu0 0
        %1134 = vmatpush1.bf16.msra.mxu0 0
        %1135 = vmatprep.subr.bf16.mxu0 0
        %1136 = vmatpush1.bf16.msra.mxu0 0
        %1137 = vmatprep.subr.bf16.mxu0 0
        %1138 = vmatpush1.bf16.msra.mxu0 0
        %1139 = vmatprep.subr.bf16.mxu0 0
        %1140 = vmatpush1.bf16.msra.mxu0 %v1118
        %1141 = vmatprep.subr.bf16.mxu0 0
        %1142 = vmatpush1.bf16.msra.mxu0 %v1117
        %1143 = vmatprep.subr.bf16.mxu0 0
        %1144 = vmatpush2.bf16.msra.mxu0 0
        %1145 = vmatprep.subr.bf16.mxu0 0
        %1146 = vmatpush2.bf16.msra.mxu0 0
        %1147 = vmatprep.subr.bf16.mxu0 0
        %1148 = vmatpush2.bf16.msra.mxu0 0
        %1149 = vmatprep.subr.bf16.mxu0 0
        %1150 = vmatpush2.bf16.msra.mxu0 0
        %1151 = vmatprep.subr.bf16.mxu0 0
        %1152 = vmatpush2.bf16.msra.mxu0 0
        %1153 = vmatprep.subr.bf16.mxu0 0
        %1154 = vmatpush2.bf16.msra.mxu0 0
        %1155 = vmatprep.subr.bf16.mxu0 0
        %1156 = vmatpush2.bf16.msra.mxu0 0
        %1157 = vmatprep.subr.bf16.mxu0 0
        %1158 = vmatpush2.bf16.msra.mxu0 0
        %1159 = vmatprep.mubr.bf16.mxu0 0
        %1160 = vmatmul.mubr.bf16.gmra.mxu0 %v1122
        %v1161 = vpop.f32.mrf.mxu0
        %v1162 = vadd.f32 0.0, %v1161
        %v1163 = vpop.f32.mrf.mxu0
        %v1164 = vpop.f32.mrf.mxu0
        %v1165 = vadd.f32 0.0, %v1164
        %v1166 = vpop.f32.mrf.mxu0
        %1167 = vmatprep.mubr.bf16.mxu0 0
        %1168 = vmatmul.mubr.bf16.gmra.mxu0 %v1125
        %v1169 = vpop.f32.mrf.mxu0
        %v1170 = vadd.f32 0.0, %v1169
        %v1171 = vpop.f32.mrf.mxu0
        %v1172 = vpop.f32.mrf.mxu0
        %v1173 = vadd.f32 0.0, %v1172
        %v1174 = vpop.f32.mrf.mxu0
        %1175 = vdwg.mxu0
        %v1176 = vadd.f32 %v1089, %v1162
        %v1177 = vadd.f32 %v1090, %v1165
        %v1178 = vadd.f32 %v1091, %v1170
        %v1179 = vadd.f32 %v1092, %v1173
        %s1180 = scalar_lea.vmem %s5, 96
        %v1181 = vld [vmem:[%s1180] sm:$0xf]
        %v1182 = vld [vmem:[%s1180 + $0x4] sm:$0xf]
        %v1183 = vld [vmem:[%s1180 + $0x8] sm:$0xf]
        %v1184 = vld [vmem:[%s1180 + $0xc] sm:$0xf]
        %v1189 = vunpack.c.l.b16 %v1181
        %v1190 = vunpack.c.l.b16 %v1182
        %v1191 = vunpack.c.l.b16 %v1183
        %v1192 = vunpack.c.l.b16 %v1184
        %v1193 = vpack.c.b16 %v1190, %v1189
        %v1194 = vpack.c.b16 %v1192, %v1191
        %1195 = vrot.lane.b32.xlu0 %v682, 108
        %v1196 = vpop.permute.xlu0 %1195
        %1197 = vrot.lane.b32.xlu0 %v683, 108
        %v1198 = vpop.permute.xlu0 %1197
        %1199 = vrot.lane.b32.xlu0 %v684, 108
        %v1200 = vpop.permute.xlu0 %1199
        %1201 = vrot.lane.b32.xlu0 %v685, 108
        %v1202 = vpop.permute.xlu0 %1201
        %vm1203 = vcmask 883712
        %v1204 = vsel %vm1203, %v1196, %v1198
        %v1205 = vsel %vm1203, %v1200, %v1202
        %v1209 = vsel %vm699, %v1193, 0
        %v1212 = vsel %vm699, %v1194, 0
        %1214 = vmatprep.subr.bf16.mxu0 0
        %1215 = vmatpush1.bf16.msra.mxu0 0
        %1216 = vmatprep.subr.bf16.mxu0 0
        %1217 = vmatpush1.bf16.msra.mxu0 0
        %1218 = vmatprep.subr.bf16.mxu0 0
        %1219 = vmatpush1.bf16.msra.mxu0 0
        %1220 = vmatprep.subr.bf16.mxu0 0
        %1221 = vmatpush1.bf16.msra.mxu0 0
        %1222 = vmatprep.subr.bf16.mxu0 0
        %1223 = vmatpush1.bf16.msra.mxu0 0
        %1224 = vmatprep.subr.bf16.mxu0 0
        %1225 = vmatpush1.bf16.msra.mxu0 0
        %1226 = vmatprep.subr.bf16.mxu0 0
        %1227 = vmatpush1.bf16.msra.mxu0 %v1205
        %1228 = vmatprep.subr.bf16.mxu0 0
        %1229 = vmatpush1.bf16.msra.mxu0 %v1204
        %1230 = vmatprep.subr.bf16.mxu0 0
        %1231 = vmatpush2.bf16.msra.mxu0 0
        %1232 = vmatprep.subr.bf16.mxu0 0
        %1233 = vmatpush2.bf16.msra.mxu0 0
        %1234 = vmatprep.subr.bf16.mxu0 0
        %1235 = vmatpush2.bf16.msra.mxu0 0
        %1236 = vmatprep.subr.bf16.mxu0 0
        %1237 = vmatpush2.bf16.msra.mxu0 0
        %1238 = vmatprep.subr.bf16.mxu0 0
        %1239 = vmatpush2.bf16.msra.mxu0 0
        %1240 = vmatprep.subr.bf16.mxu0 0
        %1241 = vmatpush2.bf16.msra.mxu0 0
        %1242 = vmatprep.subr.bf16.mxu0 0
        %1243 = vmatpush2.bf16.msra.mxu0 0
        %1244 = vmatprep.subr.bf16.mxu0 0
        %1245 = vmatpush2.bf16.msra.mxu0 0
        %1246 = vmatprep.mubr.bf16.mxu0 0
        %1247 = vmatmul.mubr.bf16.gmra.mxu0 %v1209
        %v1248 = vpop.f32.mrf.mxu0
        %v1249 = vadd.f32 0.0, %v1248
        %v1250 = vpop.f32.mrf.mxu0
        %v1251 = vpop.f32.mrf.mxu0
        %v1252 = vadd.f32 0.0, %v1251
        %v1253 = vpop.f32.mrf.mxu0
        %1254 = vmatprep.mubr.bf16.mxu0 0
        %1255 = vmatmul.mubr.bf16.gmra.mxu0 %v1212
        %v1256 = vpop.f32.mrf.mxu0
        %v1257 = vadd.f32 0.0, %v1256
        %v1258 = vpop.f32.mrf.mxu0
        %v1259 = vpop.f32.mrf.mxu0
        %v1260 = vadd.f32 0.0, %v1259
        %v1261 = vpop.f32.mrf.mxu0
        %1262 = vdwg.mxu0
        %v1263 = vadd.f32 %v1176, %v1249
        %v1264 = vadd.f32 %v1177, %v1252
        %v1265 = vadd.f32 %v1178, %v1257
        %v1266 = vadd.f32 %v1179, %v1260
        %s1267 = scalar_lea.vmem %s5, 112
        %v1268 = vld [vmem:[%s1267] sm:$0xf]
        %v1269 = vld [vmem:[%s1267 + $0x4] sm:$0xf]
        %v1270 = vld [vmem:[%s1267 + $0x8] sm:$0xf]
        %v1271 = vld [vmem:[%s1267 + $0xc] sm:$0xf]
        %v1276 = vunpack.c.l.b16 %v1268
        %v1277 = vunpack.c.l.b16 %v1269
        %v1278 = vunpack.c.l.b16 %v1270
        %v1279 = vunpack.c.l.b16 %v1271
        %v1280 = vpack.c.b16 %v1277, %v1276
        %v1281 = vpack.c.b16 %v1279, %v1278
        %1282 = vrot.lane.b32.xlu0 %v682, 107
        %v1283 = vpop.permute.xlu0 %1282
        %1284 = vrot.lane.b32.xlu0 %v683, 107
        %v1285 = vpop.permute.xlu0 %1284
        %1286 = vrot.lane.b32.xlu0 %v684, 107
        %v1287 = vpop.permute.xlu0 %1286
        %1288 = vrot.lane.b32.xlu0 %v685, 107
        %v1289 = vpop.permute.xlu0 %1288
        %vm1290 = vcmask 875520
        %v1291 = vsel %vm1290, %v1283, %v1285
        %v1292 = vsel %vm1290, %v1287, %v1289
        %v1296 = vsel %vm699, %v1280, 0
        %v1299 = vsel %vm699, %v1281, 0
        %1301 = vmatprep.subr.bf16.mxu0 0
        %1302 = vmatpush1.bf16.msra.mxu0 0
        %1303 = vmatprep.subr.bf16.mxu0 0
        %1304 = vmatpush1.bf16.msra.mxu0 0
        %1305 = vmatprep.subr.bf16.mxu0 0
        %1306 = vmatpush1.bf16.msra.mxu0 0
        %1307 = vmatprep.subr.bf16.mxu0 0
        %1308 = vmatpush1.bf16.msra.mxu0 0
        %1309 = vmatprep.subr.bf16.mxu0 0
        %1310 = vmatpush1.bf16.msra.mxu0 0
        %1311 = vmatprep.subr.bf16.mxu0 0
        %1312 = vmatpush1.bf16.msra.mxu0 0
        %1313 = vmatprep.subr.bf16.mxu0 0
        %1314 = vmatpush1.bf16.msra.mxu0 %v1292
        %1315 = vmatprep.subr.bf16.mxu0 0
        %1316 = vmatpush1.bf16.msra.mxu0 %v1291
        %1317 = vmatprep.subr.bf16.mxu0 0
        %1318 = vmatpush2.bf16.msra.mxu0 0
        %1319 = vmatprep.subr.bf16.mxu0 0
        %1320 = vmatpush2.bf16.msra.mxu0 0
        %1321 = vmatprep.subr.bf16.mxu0 0
        %1322 = vmatpush2.bf16.msra.mxu0 0
        %1323 = vmatprep.subr.bf16.mxu0 0
        %1324 = vmatpush2.bf16.msra.mxu0 0
        %1325 = vmatprep.subr.bf16.mxu0 0
        %1326 = vmatpush2.bf16.msra.mxu0 0
        %1327 = vmatprep.subr.bf16.mxu0 0
        %1328 = vmatpush2.bf16.msra.mxu0 0
        %1329 = vmatprep.subr.bf16.mxu0 0
        %1330 = vmatpush2.bf16.msra.mxu0 0
        %1331 = vmatprep.subr.bf16.mxu0 0
        %1332 = vmatpush2.bf16.msra.mxu0 0
        %1333 = vmatprep.mubr.bf16.mxu0 0
        %1334 = vmatmul.mubr.bf16.gmra.mxu0 %v1296
        %v1335 = vpop.f32.mrf.mxu0
        %v1336 = vadd.f32 0.0, %v1335
        %v1337 = vpop.f32.mrf.mxu0
        %v1338 = vpop.f32.mrf.mxu0
        %v1339 = vadd.f32 0.0, %v1338
        %v1340 = vpop.f32.mrf.mxu0
        %1341 = vmatprep.mubr.bf16.mxu0 0
        %1342 = vmatmul.mubr.bf16.gmra.mxu0 %v1299
        %v1343 = vpop.f32.mrf.mxu0
        %v1344 = vadd.f32 0.0, %v1343
        %v1345 = vpop.f32.mrf.mxu0
        %v1346 = vpop.f32.mrf.mxu0
        %v1347 = vadd.f32 0.0, %v1346
        %v1348 = vpop.f32.mrf.mxu0
        %1349 = vdwg.mxu0
        %v1350 = vadd.f32 %v1263, %v1336
        %v1351 = vadd.f32 %v1264, %v1339
        %v1352 = vadd.f32 %v1265, %v1344
        %v1353 = vadd.f32 %v1266, %v1347
        %s1354 = scalar_lea.vmem %s5, 128
        %v1355 = vld [vmem:[%s1354] sm:$0xf]
        %v1356 = vld [vmem:[%s1354 + $0x4] sm:$0xf]
        %v1357 = vld [vmem:[%s1354 + $0x8] sm:$0xf]
        %v1358 = vld [vmem:[%s1354 + $0xc] sm:$0xf]
        %v1363 = vunpack.c.l.b16 %v1355
        %v1364 = vunpack.c.l.b16 %v1356
        %v1365 = vunpack.c.l.b16 %v1357
        %v1366 = vunpack.c.l.b16 %v1358
        %v1367 = vpack.c.b16 %v1364, %v1363
        %v1368 = vpack.c.b16 %v1366, %v1365
        %1369 = vrot.lane.b32.xlu0 %v682, 106
        %v1370 = vpop.permute.xlu0 %1369
        %1371 = vrot.lane.b32.xlu0 %v683, 106
        %v1372 = vpop.permute.xlu0 %1371
        %1373 = vrot.lane.b32.xlu0 %v684, 106
        %v1374 = vpop.permute.xlu0 %1373
        %1375 = vrot.lane.b32.xlu0 %v685, 106
        %v1376 = vpop.permute.xlu0 %1375
        %vm1377 = vcmask 867328
        %v1378 = vsel %vm1377, %v1370, %v1372
        %v1379 = vsel %vm1377, %v1374, %v1376
        %v1383 = vsel %vm699, %v1367, 0
        %v1386 = vsel %vm699, %v1368, 0
        %1388 = vmatprep.subr.bf16.mxu0 0
        %1389 = vmatpush1.bf16.msra.mxu0 0
        %1390 = vmatprep.subr.bf16.mxu0 0
        %1391 = vmatpush1.bf16.msra.mxu0 0
        %1392 = vmatprep.subr.bf16.mxu0 0
        %1393 = vmatpush1.bf16.msra.mxu0 0
        %1394 = vmatprep.subr.bf16.mxu0 0
        %1395 = vmatpush1.bf16.msra.mxu0 0
        %1396 = vmatprep.subr.bf16.mxu0 0
        %1397 = vmatpush1.bf16.msra.mxu0 0
        %1398 = vmatprep.subr.bf16.mxu0 0
        %1399 = vmatpush1.bf16.msra.mxu0 0
        %1400 = vmatprep.subr.bf16.mxu0 0
        %1401 = vmatpush1.bf16.msra.mxu0 %v1379
        %1402 = vmatprep.subr.bf16.mxu0 0
        %1403 = vmatpush1.bf16.msra.mxu0 %v1378
        %1404 = vmatprep.subr.bf16.mxu0 0
        %1405 = vmatpush2.bf16.msra.mxu0 0
        %1406 = vmatprep.subr.bf16.mxu0 0
        %1407 = vmatpush2.bf16.msra.mxu0 0
        %1408 = vmatprep.subr.bf16.mxu0 0
        %1409 = vmatpush2.bf16.msra.mxu0 0
        %1410 = vmatprep.subr.bf16.mxu0 0
        %1411 = vmatpush2.bf16.msra.mxu0 0
        %1412 = vmatprep.subr.bf16.mxu0 0
        %1413 = vmatpush2.bf16.msra.mxu0 0
        %1414 = vmatprep.subr.bf16.mxu0 0
        %1415 = vmatpush2.bf16.msra.mxu0 0
        %1416 = vmatprep.subr.bf16.mxu0 0
        %1417 = vmatpush2.bf16.msra.mxu0 0
        %1418 = vmatprep.subr.bf16.mxu0 0
        %1419 = vmatpush2.bf16.msra.mxu0 0
        %1420 = vmatprep.mubr.bf16.mxu0 0
        %1421 = vmatmul.mubr.bf16.gmra.mxu0 %v1383
        %v1422 = vpop.f32.mrf.mxu0
        %v1423 = vadd.f32 0.0, %v1422
        %v1424 = vpop.f32.mrf.mxu0
        %v1425 = vpop.f32.mrf.mxu0
        %v1426 = vadd.f32 0.0, %v1425
        %v1427 = vpop.f32.mrf.mxu0
        %1428 = vmatprep.mubr.bf16.mxu0 0
        %1429 = vmatmul.mubr.bf16.gmra.mxu0 %v1386
        %v1430 = vpop.f32.mrf.mxu0
        %v1431 = vadd.f32 0.0, %v1430
        %v1432 = vpop.f32.mrf.mxu0
        %v1433 = vpop.f32.mrf.mxu0
        %v1434 = vadd.f32 0.0, %v1433
        %v1435 = vpop.f32.mrf.mxu0
        %1436 = vdwg.mxu0
        %v1437 = vadd.f32 %v1350, %v1423
        %v1438 = vadd.f32 %v1351, %v1426
        %v1439 = vadd.f32 %v1352, %v1431
        %v1440 = vadd.f32 %v1353, %v1434
        %v1441 = vld [vmem:[%s532] sm:$0xff]
        %v1442 = vld [vmem:[%s532 + $0x8] sm:$0xff]
        %v1443 = vld [vmem:[%s532 + $0x10] sm:$0xff]
        %v1444 = vld [vmem:[%s532 + $0x18] sm:$0xff]
        %1446 = vset.pattern.permute.xlu0 0
        %1447 = vperm.xlu0 %1446, %v1441
        %v1448 = vpop.permute.xlu0 %1447
        %1451 = vset.pattern.permute.xlu0 0
        %1452 = vperm.xlu0 %1451, %v1442
        %v1453 = vpop.permute.xlu0 %1452
        %1456 = vset.pattern.permute.xlu0 0
        %1457 = vperm.xlu0 %1456, %v1443
        %v1458 = vpop.permute.xlu0 %1457
        %1461 = vset.pattern.permute.xlu0 0
        %1462 = vperm.xlu0 %1461, %v1444
        %v1463 = vpop.permute.xlu0 %1462
        %v1465 = vmul.f32 %v1437, %v1448
        %v1466 = vmul.f32 %v1438, %v1453
        %v1467 = vmul.f32 %v1439, %v1458
        %v1468 = vmul.f32 %v1440, %v1463
        %1469 = vst [vmem:[%s506] sm:$0xff] %v1465
        %1470 = vst [vmem:[%s506 + $0x8] sm:$0xff] %v1466
        %1471 = vst [vmem:[%s506 + $0x10] sm:$0xff] %v1467
        %1472 = vst [vmem:[%s506 + $0x18] sm:$0xff] %v1468
        %v1473 = vpack.c.bf16 %v1466, %v1465
        %v1474 = vpack.c.bf16 %v1468, %v1467
        %v1475 = vld [vmem:[%s6] sm:$0x1]
        %v1477 = vsel %vm699, %v1475, 0
        %1479 = vmatprep.subr.bf16.mxu0 0
        %1480 = vmatpush1.bf16.msra.mxu0 0
        %1481 = vmatprep.subr.bf16.mxu0 0
        %1482 = vmatpush1.bf16.msra.mxu0 0
        %1483 = vmatprep.subr.bf16.mxu0 0
        %1484 = vmatpush1.bf16.msra.mxu0 0
        %1485 = vmatprep.subr.bf16.mxu0 0
        %1486 = vmatpush1.bf16.msra.mxu0 0
        %1487 = vmatprep.subr.bf16.mxu0 0
        %1488 = vmatpush1.bf16.msra.mxu0 0
        %1489 = vmatprep.subr.bf16.mxu0 0
        %1490 = vmatpush1.bf16.msra.mxu0 0
        %1491 = vmatprep.subr.bf16.mxu0 0
        %1492 = vmatpush1.bf16.msra.mxu0 %v1474
        %1493 = vmatprep.subr.bf16.mxu0 0
        %1494 = vmatpush1.bf16.msra.mxu0 %v1473
        %1495 = vmatprep.subr.bf16.mxu0 0
        %1496 = vmatpush2.bf16.msra.mxu0 0
        %1497 = vmatprep.subr.bf16.mxu0 0
        %1498 = vmatpush2.bf16.msra.mxu0 0
        %1499 = vmatprep.subr.bf16.mxu0 0
        %1500 = vmatpush2.bf16.msra.mxu0 0
        %1501 = vmatprep.subr.bf16.mxu0 0
        %1502 = vmatpush2.bf16.msra.mxu0 0
        %1503 = vmatprep.subr.bf16.mxu0 0
        %1504 = vmatpush2.bf16.msra.mxu0 0
        %1505 = vmatprep.subr.bf16.mxu0 0
        %1506 = vmatpush2.bf16.msra.mxu0 0
        %1507 = vmatprep.subr.bf16.mxu0 0
        %1508 = vmatpush2.bf16.msra.mxu0 0
        %1509 = vmatprep.subr.bf16.mxu0 0
        %1510 = vmatpush2.bf16.msra.mxu0 0
        %1511 = vmatprep.mubr.bf16.mxu0 0
        %1512 = vmatmul.mubr.bf16.gmra.mxu0 %v1477
        %v1513 = vpop.f32.mrf.mxu0
        %v1514 = vadd.f32 0.0, %v1513
        %v1515 = vpop.f32.mrf.mxu0
        %v1516 = vpop.f32.mrf.mxu0
        %v1517 = vpop.f32.mrf.mxu0
        %1518 = vdwg.mxu0
        %1519 = vst [vmem:[%s512] sm:$0x1] %v1514
        %v1520 = vld [vmem:[%s8] sm:$0x3]
        %v1521 = vld [vmem:[%s537] sm:$0xff]
        %v1522 = vld [vmem:[%s537 + $0x8] sm:$0xff]
        %v1523 = vld [vmem:[%s537 + $0x10] sm:$0xff]
        %v1524 = vld [vmem:[%s537 + $0x18] sm:$0xff]
        %1526 = vset.pattern.permute.xlu0 0
        %1527 = vperm.xlu0 %1526, %v1521
        %v1528 = vpop.permute.xlu0 %1527
        %1531 = vset.pattern.permute.xlu0 0
        %1532 = vperm.xlu0 %1531, %v1522
        %v1533 = vpop.permute.xlu0 %1532
        %1536 = vset.pattern.permute.xlu0 0
        %1537 = vperm.xlu0 %1536, %v1523
        %v1538 = vpop.permute.xlu0 %1537
        %1541 = vset.pattern.permute.xlu0 0
        %1542 = vperm.xlu0 %1541, %v1524
        %v1543 = vpop.permute.xlu0 %1542
        %v1545 = vmul.f32 %v1465, %v1528
        %v1546 = vmul.f32 %v1466, %v1533
        %v1547 = vmul.f32 %v1467, %v1538
        %v1548 = vmul.f32 %v1468, %v1543
        %v1549 = vpack.c.bf16 %v1546, %v1545
        %v1550 = vpack.c.bf16 %v1548, %v1547
        %v1552 = vsel %vm699, %v1520, 0
        %1554 = vmatprep.subr.bf16.mxu0 0
        %1555 = vmatpush1.bf16.msra.mxu0 0
        %1556 = vmatprep.subr.bf16.mxu0 0
        %1557 = vmatpush1.bf16.msra.mxu0 0
        %1558 = vmatprep.subr.bf16.mxu0 0
        %1559 = vmatpush1.bf16.msra.mxu0 0
        %1560 = vmatprep.subr.bf16.mxu0 0
        %1561 = vmatpush1.bf16.msra.mxu0 0
        %1562 = vmatprep.subr.bf16.mxu0 0
        %1563 = vmatpush1.bf16.msra.mxu0 0
        %1564 = vmatprep.subr.bf16.mxu0 0
        %1565 = vmatpush1.bf16.msra.mxu0 0
        %1566 = vmatprep.subr.bf16.mxu0 0
        %1567 = vmatpush1.bf16.msra.mxu0 %v1550
        %1568 = vmatprep.subr.bf16.mxu0 0
        %1569 = vmatpush1.bf16.msra.mxu0 %v1549
        %1570 = vmatprep.subr.bf16.mxu0 0
        %1571 = vmatpush2.bf16.msra.mxu0 0
        %1572 = vmatprep.subr.bf16.mxu0 0
        %1573 = vmatpush2.bf16.msra.mxu0 0
        %1574 = vmatprep.subr.bf16.mxu0 0
        %1575 = vmatpush2.bf16.msra.mxu0 0
        %1576 = vmatprep.subr.bf16.mxu0 0
        %1577 = vmatpush2.bf16.msra.mxu0 0
        %1578 = vmatprep.subr.bf16.mxu0 0
        %1579 = vmatpush2.bf16.msra.mxu0 0
        %1580 = vmatprep.subr.bf16.mxu0 0
        %1581 = vmatpush2.bf16.msra.mxu0 0
        %1582 = vmatprep.subr.bf16.mxu0 0
        %1583 = vmatpush2.bf16.msra.mxu0 0
        %1584 = vmatprep.subr.bf16.mxu0 0
        %1585 = vmatpush2.bf16.msra.mxu0 0
        %1586 = vmatprep.mubr.bf16.mxu0 0
        %1587 = vmatmul.mubr.bf16.gmra.mxu0 %v1552
        %v1588 = vpop.f32.mrf.mxu0
        %v1589 = vadd.f32 0.0, %v1588
        %v1590 = vpop.f32.mrf.mxu0
        %v1591 = vpop.f32.mrf.mxu0
        %v1592 = vpop.f32.mrf.mxu0
        %1593 = vdwg.mxu0
        %1594 = vst [vmem:[%s541] sm:$0x7] %v1589
        %s1595 = sand.u32 %s262, 1
        %s1596 = scalar_lea.sflag [#allocation5], %s1595
        %s1597 = sand.u32 %s262, 1
        %s1598 = smul.addr %s1597, 32
        %s1599 = scalar_lea.vmem [#allocation8], %s1598
        %s1600 = sand.u32 %s288, 1
        %s1601 = scalar_lea.sflag [#allocation10], %s1600
        %s1602 = sand.u32 %s288, 1
        %s1603 = scalar_lea.vmem [#allocation9], %s1602
        %p1604 = scmp.lt.s32.totalorder %s35, 1
        %s1605 = scalar_select %p1604, %s35, 1
        %s1606 = smul.addr %s1605, 4
        %s1607 = scalar_lea.vmem %s11, %s1606
        // Predicated region
        $region65: #{tpu_custom_call.1} parent=55 // pred_check
          %p1608 = pneg %p272
        $region66: #{tpu_custom_call.1} parent=55 // pred_check_branch
          %1610 = sbr.rel (%p1608) target = $region68
        $region67: #{tpu_custom_call.1} parent=55 // pred_region
          %s1612 = ssub.s32 512, 512
          %1613 = vsyncadd %s1596, %s1612
          %s1614 = smul.addr %s35, 4
          %s1615 = smul.addr %s1614, 128
          %s1616 = scalar_lea.hbm %s9, %s1615
          %s1617 = sshll.u32 %s1599, 4
          %s1618 = int_to_ptr.vmem [resolvable:$true] %s1617
          %1623 = dma.vmem_to_hbm [thread:$0]  %s1618, 512, %s1616, %s1596, 128, 128, 8
        $region68: #{tpu_custom_call.1} parent=55 // pred_fallthru
          _
        // Predicated region
        $region69: #{tpu_custom_call.1} parent=55 // pred_check
          %p1624 = pneg %p298
        $region70: #{tpu_custom_call.1} parent=55 // pred_check_branch
          %1626 = sbr.rel (%p1624) target = $region72
        $region71: #{tpu_custom_call.1} parent=55 // pred_region
          %s1628 = ssub.s32 16, 16
          %1629 = vsyncadd %s1601, %s1628
          %s1630 = smul.addr %s35, 16
          %s1631 = scalar_lea.hbm %s10, %s1630
          %s1633 = sshll.u32 %s1603, 4
          %s1634 = int_to_ptr.vmem [resolvable:$true] %s1633
          %1636 = dma.vmem_to_hbm [thread:$0]  %s1634, 16, %s1631, %s1601
        $region72: #{tpu_custom_call.1} parent=55 // pred_fallthru
          _
        // Predicated region
        $region73: #{tpu_custom_call.1} parent=55 // pred_check
          %p1637 = pneg %p324
        $region74: #{tpu_custom_call.1} parent=55 // pred_check_branch
          %1639 = sbr.rel (%p1637) target = $region76
        $region75: #{tpu_custom_call.1} parent=55 // pred_region
          _
        $region76: #{tpu_custom_call.1} parent=55 // pred_fallthru
          _
      $region56: #{tpu_custom_call.1} parent=5 // pred_fallthru
        _
      %p1640 = scmp.le.s32.totalorder 2, %s30
      // Predicated region
      $region77: #{tpu_custom_call.1} parent=5 // pred_check
        %p1641 = pneg %p1640
      $region78: #{tpu_custom_call.1} parent=5 // pred_check_branch
        %1643 = sbr.rel (%p1641) target = $region80
      $region79: #{tpu_custom_call.1} parent=5 // pred_region
        %s1644 = ssub.s32 %s30, 2
        // Predicated region
        $region81: #{tpu_custom_call.1} parent=79 // pred_check
          %p1645 = pneg %p278
        $region82: #{tpu_custom_call.1} parent=79 // pred_check_branch
          %1647 = sbr.rel (%p1645) target = $region84
        $region83: #{tpu_custom_call.1} parent=79 // pred_region
          %s1648 = sand.u32 %s263, 1
          %s1649 = scalar_lea.sflag [#allocation5], %s1648
          %s1650 = sand.u32 %s263, 1
          %s1651 = smul.addr %s1650, 32
          %s1652 = scalar_lea.vmem [#allocation8], %s1651
          %1653 = dma.done %s1649, 512
        $region84: #{tpu_custom_call.1} parent=79 // pred_fallthru
          _
        // Predicated region
        $region85: #{tpu_custom_call.1} parent=79 // pred_check
          %p1654 = pneg %p304
        $region86: #{tpu_custom_call.1} parent=79 // pred_check_branch
          %1656 = sbr.rel (%p1654) target = $region88
        $region87: #{tpu_custom_call.1} parent=79 // pred_region
          %s1657 = sand.u32 %s289, 1
          %s1658 = scalar_lea.sflag [#allocation10], %s1657
          %s1659 = sand.u32 %s289, 1
          %s1660 = scalar_lea.vmem [#allocation9], %s1659
          %1661 = dma.done %s1658, 16
        $region88: #{tpu_custom_call.1} parent=79 // pred_fallthru
          _
        // Predicated region
        $region89: #{tpu_custom_call.1} parent=79 // pred_check
          %p1662 = pneg %p330
        $region90: #{tpu_custom_call.1} parent=79 // pred_check_branch
          %1664 = sbr.rel (%p1662) target = $region92
        $region91: #{tpu_custom_call.1} parent=79 // pred_region
          %p1665 = scmp.lt.s32.totalorder %s36, 1
          %s1666 = scalar_select %p1665, %s36, 1
          %s1667 = smul.addr %s1666, 4
          %s1668 = scalar_lea.vmem %s11, %s1667
        $region92: #{tpu_custom_call.1} parent=79 // pred_fallthru
          _
      $region80: #{tpu_custom_call.1} parent=5 // pred_fallthru
        _
    $region6: #{tpu_custom_call.1} parent=1 // loop_footer
      %s34 = sadd.s32 1, %s30
    $region7: #{tpu_custom_call.1} parent=1 // loop_footer_branch
      %29 = sbr.rel target = $region3
    $region8: #{tpu_custom_call.1} parent=1 // loop_exit
      _
    %1669 = vsyncpa [#allocation4], 1
    %s1670 = scalar_lea.sflag [#allocation4], 1
    %1671 = vsyncpa %s1670, 1
    %1672 = vsyncpa [#allocation7], 1
    %s1673 = scalar_lea.sflag [#allocation7], 1
    %1674 = vsyncpa %s1673, 1
    %1675 = vsyncpa [#allocation5], 1
    %s1676 = scalar_lea.sflag [#allocation5], 1
    %1677 = vsyncpa %s1676, 1
    %1678 = vsyncpa [#allocation10], 1
    %s1679 = scalar_lea.sflag [#allocation10], 1
    %1680 = vsyncpa %s1679, 1

</llo_original>
